<compile_context>
chip_gen: v7x
topology: tpu7x:2x2x1
jax: 0.10.0
libtpu: 0.0.40
codegen_flags: <defaults>
</compile_context>

<pallas_src>
import jax
import jax.numpy as jnp
import numpy as np
from jax import lax
from jax.experimental import pallas as pl
from jax.experimental.pallas import tpu as pltpu


# ----------------------------- Pallas kernel ------------------------------ #
def _make_fsmn_branch_kernel(n_taps: int):
    """One FSMN weight-branch applied to the stacked (x_re, x_im) token slab."""

    def kernel(smod_ref, x_ref, wlin_ref, blin_ref, wproj_ref, wrev_ref, o_ref):
        # smod_ref : (1, Ttok)      f32   per-token position s within its sequence
        # x_ref    : (D, Ttok)      bf16  input (channels on sublanes, tokens on lanes)
        # wlin_ref : (1, H, D)      bf16  nn.Linear weight, PyTorch (out, in) layout
        # blin_ref : (1, H, 1)      f32   nn.Linear bias
        # wproj_ref: (1, D, H)      bf16  projection weight (out, in)
        # wrev_ref : (1, D, n_taps) f32   FIR taps, wrev[:, j] = w_conv[:, L-1-j]
        # o_ref    : (1, D, Ttok)   f32   g(z) = p + causal depthwise conv(p)
        x = x_ref[...]
        smod = smod_ref[...]

        # hidden = relu(W_lin @ x + b)   -> (H, Ttok), lane-dense f32 accumulator
        h = jnp.dot(wlin_ref[0], x, preferred_element_type=jnp.float32)
        h = jnp.maximum(h + blin_ref[0], 0.0)

        # p = W_proj @ hidden            -> (D, Ttok)
        p = jnp.dot(wproj_ref[0], h.astype(jnp.bfloat16),
                    preferred_element_type=jnp.float32)

        wrev = wrev_ref[0]               # (D, n_taps) f32
        ttok = p.shape[1]

        # g = p + sum_j wrev[:, j] * p[:, token - j]   (causal, within each sample)
        acc = p + p * wrev[:, 0:1]       # delay-0 tap needs no shift / mask
        for j in range(1, n_taps):
            # lane-roll by j: rolled[:, t] = p[:, t - j]; the float mask (s >= j)
            # zeroes both the circular wrap and any cross-sample leakage.
            rolled = jnp.concatenate([p[:, ttok - j:], p[:, :ttok - j]], axis=1)
            maskf = (smod >= j).astype(jnp.float32)          # (1, Ttok)
            acc = acc + rolled * wrev[:, j:j + 1] * maskf

        o_ref[0] = acc.astype(o_ref.dtype)

    return kernel


# ------------------------------- Wrapper ----------------------------------- #
def complex_uni_deep_fsmn_l1(x, w_lin_re, b_lin_re, w_proj_re, w_conv_re,
                             w_lin_im, b_lin_im, w_proj_im, w_conv_im):
    """Pallas forward of ComplexUniDeepFsmn_L1.

    x        : (b, c, h, T, 2) float32
    w_lin_*  : (H, c)        nn.Linear(c, H).weight
    b_lin_*  : (H,)          nn.Linear(c, H).bias
    w_proj_* : (c, H)        nn.Linear(H, c, bias=False).weight
    w_conv_* : (c, 1, L, 1)  depthwise nn.Conv2d(c, c, [L, 1], groups=c).weight
    returns  : (b, c, h, T, 2) float32
    """
    b, c, S, T, _ = x.shape
    D = c
    H = w_lin_re.shape[0]
    L = w_conv_re.shape[2]
    N = b * T
    NS = N * S
    Ttok = 2 * NS                       # {re, im} halves stacked on the token axis
    n_taps = min(L, S)                  # taps with delay >= S never contribute

    # ---- glue: PyTorch layout -> token slab (channels x tokens) ----
    # (b, c, h, T, 2) -> (b, T, h, c, 2) -> (b*T, h, c, 2)
    z = jnp.transpose(x, (0, 3, 2, 1, 4)).reshape(N, S, D, 2)
    zc = jnp.concatenate([z[..., 0], z[..., 1]], axis=0)       # (2N, S, D)
    xT = jnp.transpose(zc.reshape(Ttok, D), (1, 0))            # (D, Ttok), tokens on lanes

    # per-token position s inside its sequence (causal mask data for the kernel)
    smod = jnp.tile(jnp.arange(S, dtype=jnp.float32), 2 * N)[None, :]   # (1, Ttok)

    # ---- glue: stack the two weight branches (0 = re-FSMN, 1 = im-FSMN) ----
    wlin_all = jnp.stack([w_lin_re, w_lin_im]).astype(jnp.bfloat16)     # (2, H, D)
    blin_all = jnp.stack([b_lin_re, b_lin_im])[..., None]               # (2, H, 1) f32
    wproj_all = jnp.stack([w_proj_re, w_proj_im]).astype(jnp.bfloat16)  # (2, D, H)

    def rev_taps(w):                    # (D,1,L,1) -> (D, n_taps); tap j = delay j
        return w.reshape(D, L)[:, ::-1][:, :n_taps]

    wrev_all = jnp.stack([rev_taps(w_conv_re), rev_taps(w_conv_im)])    # (2, D, n_taps)

    g = pl.pallas_call(
        _make_fsmn_branch_kernel(n_taps),
        out_shape=jax.ShapeDtypeStruct((2, D, Ttok), jnp.float32),
        grid=(2,),
        in_specs=[
            pl.BlockSpec((1, Ttok), lambda r: (0, 0)),           # smod (shared)
            pl.BlockSpec((D, Ttok), lambda r: (0, 0)),           # input slab (shared)
            pl.BlockSpec((1, H, D), lambda r: (r, 0, 0)),        # W_lin   per branch
            pl.BlockSpec((1, H, 1), lambda r: (r, 0, 0)),        # b_lin   per branch
            pl.BlockSpec((1, D, H), lambda r: (r, 0, 0)),        # W_proj  per branch
            pl.BlockSpec((1, D, n_taps), lambda r: (r, 0, 0)),   # FIR taps per branch
        ],
        out_specs=pl.BlockSpec((1, D, Ttok), lambda r: (r, 0, 0)),
        compiler_params=pltpu.CompilerParams(dimension_semantics=("parallel",)),
    )(smod, xT.astype(jnp.bfloat16), wlin_all, blin_all, wproj_all, wrev_all)

    # ---- glue: complex recombination + exact-f32 residual ----
    xr, xi = xT[:, :NS], xT[:, NS:]
    g_re_xr, g_re_xi = g[0, :, :NS], g[0, :, NS:]
    g_im_xr, g_im_xi = g[1, :, :NS], g[1, :, NS:]
    real_t = xr - xi + g_re_xr - g_im_xi                        # (D, NS)
    imag_t = xr + xi + g_re_xi + g_im_xr

    def back(y):                        # (D, N*S) -> (b, c, h, T)
        return jnp.transpose(y.reshape(D, b, T, S), (1, 0, 3, 2))

    return jnp.stack([back(real_t), back(imag_t)], axis=-1)     # (b, c, h, T, 2)


# ----------------------- Pure-JAX reference (for checking) ----------------- #
def _uni_deep_fsmn_ref(inp, w_lin, b_lin, w_proj, w_conv, *, match_bf16):
    """UniDeepFsmn.forward with PyTorch semantics.  inp: (NB, S, Din)."""
    L = w_conv.shape[2]
    cast = ((lambda a: a.astype(jnp.bfloat16).astype(jnp.float32))
            if match_bf16 else (lambda a: a))
    hi = jnp.einsum('nsd,hd->nsh', cast(inp), cast(w_lin),
                    precision=lax.Precision.HIGHEST) + b_lin
    f1 = jnp.maximum(hi, 0.0)
    p1 = jnp.einsum('nsh,oh->nso', cast(f1), cast(w_proj),
                    precision=lax.Precision.HIGHEST)
    wc = w_conv.reshape(w_conv.shape[0], L)                     # (Dout, L)
    pad = jnp.pad(p1, ((0, 0), (L - 1, 0), (0, 0)))
    S = p1.shape[1]
    conv = jnp.zeros_like(p1)
    for k in range(L):
        conv = conv + pad[:, k:k + S, :] * wc[:, k][None, None, :]
    return inp + p1 + conv


def _complex_fsmn_l1_ref(x, w_lin_re, b_lin_re, w_proj_re, w_conv_re,
                         w_lin_im, b_lin_im, w_proj_im, w_conv_im, *, match_bf16):
    b, c, S, T, _ = x.shape
    z = jnp.transpose(x, (0, 3, 2, 1, 4)).reshape(b * T, S, c, 2)
    fr = lambda u: _uni_deep_fsmn_ref(u, w_lin_re, b_lin_re, w_proj_re, w_conv_re,
                                      match_bf16=match_bf16)
    fi = lambda u: _uni_deep_fsmn_ref(u, w_lin_im, b_lin_im, w_proj_im, w_conv_im,
                                      match_bf16=match_bf16)
    real = fr(z[..., 0]) - fi(z[..., 1])
    imag = fr(z[..., 1]) + fi(z[..., 0])
    out = jnp.stack([real, imag], axis=-1).reshape(b, T, S, c, 2)
    return jnp.transpose(out, (0, 3, 2, 1, 4))                  # (b, c, h, T, 2)


# ---------------------------------- Main ----------------------------------- #
if __name__ == "__main__":
    # ComplexUniDeepFsmn_L1(nIn=c, nHidden): the residual inside UniDeepFsmn
    # requires nIn == nHidden, so use a small common width.
    b, c, hfreq, T = 2, 32, 16, 8
    nHidden, lorder = c, 20

    key = jax.random.PRNGKey(0)
    ks = jax.random.split(key, 9)
    x = jax.random.normal(ks[0], (b, c, hfreq, T, 2), jnp.float32)
    sc = 0.1
    w_lin_re = sc * jax.random.normal(ks[1], (nHidden, c), jnp.float32)
    b_lin_re = sc * jax.random.normal(ks[2], (nHidden,), jnp.float32)
    w_proj_re = sc * jax.random.normal(ks[3], (c, nHidden), jnp.float32)
    w_conv_re = sc * jax.random.normal(ks[4], (c, 1, lorder, 1), jnp.float32)
    w_lin_im = sc * jax.random.normal(ks[5], (nHidden, c), jnp.float32)
    b_lin_im = sc * jax.random.normal(ks[6], (nHidden,), jnp.float32)
    w_proj_im = sc * jax.random.normal(ks[7], (c, nHidden), jnp.float32)
    w_conv_im = sc * jax.random.normal(ks[8], (c, 1, lorder, 1), jnp.float32)

    out = complex_uni_deep_fsmn_l1(x, w_lin_re, b_lin_re, w_proj_re, w_conv_re,
                                   w_lin_im, b_lin_im, w_proj_im, w_conv_im)
    out = jax.block_until_ready(out)
    assert out.shape == (b, c, hfreq, T, 2), out.shape

    # (1) structural check: reference with the same bf16 matmul-operand rounding
    #     (differences = f32 accumulation order only, plus rare bf16 re-rounding
    #      boundary cases of the hidden activation).
    ref_m = _complex_fsmn_l1_ref(x, w_lin_re, b_lin_re, w_proj_re, w_conv_re,
                                 w_lin_im, b_lin_im, w_proj_im, w_conv_im,
                                 match_bf16=True)
    ref_m = jax.block_until_ready(ref_m)
    np.testing.assert_allclose(np.asarray(out), np.asarray(ref_m),
                               atol=5e-3, rtol=5e-3)

    # (2) sanity vs full-f32 PyTorch-faithful math (bounds the bf16 MXU error).
    ref_f = _complex_fsmn_l1_ref(x, w_lin_re, b_lin_re, w_proj_re, w_conv_re,
                                 w_lin_im, b_lin_im, w_proj_im, w_conv_im,
                                 match_bf16=False)
    ref_f = jax.block_until_ready(ref_f)
    np.testing.assert_allclose(np.asarray(out), np.asarray(ref_f),
                               atol=5e-2, rtol=5e-2)

    print("KERNEL_OK")
</pallas_src>

<mosaic_0001>
module attributes {stable_mosaic.version = 11 : i64} {
  func.func @kernel(%arg0: i32, %arg1: memref<1x512xf32, #tpu.memory_space<vmem>>, %arg2: memref<32x512xbf16, #tpu.memory_space<vmem>>, %arg3: memref<1x32x32xbf16, #tpu.memory_space<vmem>>, %arg4: memref<1x32x1xf32, #tpu.memory_space<vmem>>, %arg5: memref<1x32x32xbf16, #tpu.memory_space<vmem>>, %arg6: memref<1x32x16xf32, #tpu.memory_space<vmem>>, %arg7: memref<1x32x512xf32, #tpu.memory_space<vmem>>) attributes {dimension_semantics = [#tpu.dimension_semantics<parallel>], iteration_bounds = array<i64: 2>, scalar_prefetch = 0 : i64, scratch_operands = 0 : i64, tpu.core_type = #tpu.core_type<tc>, window_params = [{pipeline_mode = #tpu.pipeline_mode<synchronous>, transform_indices = @transform_0, window_bounds = array<i64: 1, 512>}, {pipeline_mode = #tpu.pipeline_mode<synchronous>, transform_indices = @transform_1, window_bounds = array<i64: 32, 512>}, {transform_indices = @transform_2, window_bounds = array<i64: 1, 32, 32>}, {transform_indices = @transform_3, window_bounds = array<i64: 1, 32, 1>}, {transform_indices = @transform_4, window_bounds = array<i64: 1, 32, 32>}, {transform_indices = @transform_5, window_bounds = array<i64: 1, 32, 16>}, {transform_indices = @transform_6, window_bounds = array<i64: 1, 32, 512>}]} {
    %c0 = arith.constant 0 : index
    %c0_0 = arith.constant 0 : index
    %0 = vector.load %arg2[%c0, %c0_0] : memref<32x512xbf16, #tpu.memory_space<vmem>>, vector<32x512xbf16>
    %c0_1 = arith.constant 0 : index
    %c0_2 = arith.constant 0 : index
    %1 = vector.load %arg1[%c0_1, %c0_2] : memref<1x512xf32, #tpu.memory_space<vmem>>, vector<1x512xf32>
    %c0_3 = arith.constant 0 : index
    %c0_4 = arith.constant 0 : index
    %c0_5 = arith.constant 0 : index
    %2 = vector.load %arg3[%c0_3, %c0_4, %c0_5] : memref<1x32x32xbf16, #tpu.memory_space<vmem>>, vector<1x32x32xbf16>
    %3 = vector.shape_cast %2 : vector<1x32x32xbf16> to vector<32x32xbf16>
    %cst = arith.constant dense<0.000000e+00> : vector<32x512xf32>
    %4 = tpu.matmul %3, %0, %cst {dimension_numbers = #tpu.dot_dimension_numbers<[1], [0], [0], [1], [0, 0, 1, 1], [], []>} : vector<32x32xbf16>, vector<32x512xbf16>, vector<32x512xf32> -> vector<32x512xf32>
    %c0_6 = arith.constant 0 : index
    %c0_7 = arith.constant 0 : index
    %c0_8 = arith.constant 0 : index
    %5 = vector.load %arg4[%c0_6, %c0_7, %c0_8] : memref<1x32x1xf32, #tpu.memory_space<vmem>>, vector<1x32x1xf32>
    %6 = vector.shape_cast %5 : vector<1x32x1xf32> to vector<32x1xf32>
    %7 = vector.broadcast %6 : vector<32x1xf32> to vector<32x512xf32>
    %8 = arith.addf %4, %7 : vector<32x512xf32>
    %cst_9 = arith.constant 0.000000e+00 : f32
    %9 = vector.broadcast %cst_9 : f32 to vector<32x512xf32>
    %10 = arith.maximumf %8, %9 : vector<32x512xf32>
    %c0_10 = arith.constant 0 : index
    %c0_11 = arith.constant 0 : index
    %c0_12 = arith.constant 0 : index
    %11 = vector.load %arg5[%c0_10, %c0_11, %c0_12] : memref<1x32x32xbf16, #tpu.memory_space<vmem>>, vector<1x32x32xbf16>
    %12 = vector.shape_cast %11 : vector<1x32x32xbf16> to vector<32x32xbf16>
    %13 = arith.truncf %10 : vector<32x512xf32> to vector<32x512xbf16>
    %cst_13 = arith.constant dense<0.000000e+00> : vector<32x512xf32>
    %14 = tpu.matmul %12, %13, %cst_13 {dimension_numbers = #tpu.dot_dimension_numbers<[1], [0], [0], [1], [0, 0, 1, 1], [], []>} : vector<32x32xbf16>, vector<32x512xbf16>, vector<32x512xf32> -> vector<32x512xf32>
    %c0_14 = arith.constant 0 : index
    %c0_15 = arith.constant 0 : index
    %c0_16 = arith.constant 0 : index
    %15 = vector.load %arg6[%c0_14, %c0_15, %c0_16] : memref<1x32x16xf32, #tpu.memory_space<vmem>>, vector<1x32x16xf32>
    %16 = vector.shape_cast %15 : vector<1x32x16xf32> to vector<32x16xf32>
    %17 = vector.extract_strided_slice %16 {offsets = [0, 0], sizes = [32, 1], strides = [1, 1]} : vector<32x16xf32> to vector<32x1xf32>
    %18 = vector.broadcast %17 : vector<32x1xf32> to vector<32x512xf32>
    %19 = arith.mulf %14, %18 : vector<32x512xf32>
    %20 = arith.addf %14, %19 : vector<32x512xf32>
    %21 = vector.extract_strided_slice %14 {offsets = [0, 511], sizes = [32, 1], strides = [1, 1]} : vector<32x512xf32> to vector<32x1xf32>
    %22 = vector.extract_strided_slice %14 {offsets = [0, 0], sizes = [32, 511], strides = [1, 1]} : vector<32x512xf32> to vector<32x511xf32>
    %23 = tpu.concatenate %21, %22 in 1 : vector<32x1xf32>, vector<32x511xf32> -> vector<32x512xf32>
    %cst_17 = arith.constant 1.000000e+00 : f32
    %24 = vector.broadcast %cst_17 : f32 to vector<1x512xf32>
    %25 = arith.cmpf oge, %1, %24 : vector<1x512xf32>
    %26 = arith.extui %25 : vector<1x512xi1> to vector<1x512xi32>
    %27 = arith.sitofp %26 : vector<1x512xi32> to vector<1x512xf32>
    %28 = vector.extract_strided_slice %16 {offsets = [0, 1], sizes = [32, 1], strides = [1, 1]} : vector<32x16xf32> to vector<32x1xf32>
    %29 = vector.broadcast %28 : vector<32x1xf32> to vector<32x512xf32>
    %30 = arith.mulf %23, %29 : vector<32x512xf32>
    %31 = vector.broadcast %27 : vector<1x512xf32> to vector<32x512xf32>
    %32 = arith.mulf %30, %31 : vector<32x512xf32>
    %33 = arith.addf %20, %32 : vector<32x512xf32>
    %34 = vector.extract_strided_slice %14 {offsets = [0, 510], sizes = [32, 2], strides = [1, 1]} : vector<32x512xf32> to vector<32x2xf32>
    %35 = vector.extract_strided_slice %14 {offsets = [0, 0], sizes = [32, 510], strides = [1, 1]} : vector<32x512xf32> to vector<32x510xf32>
    %36 = tpu.concatenate %34, %35 in 1 : vector<32x2xf32>, vector<32x510xf32> -> vector<32x512xf32>
    %cst_18 = arith.constant 2.000000e+00 : f32
    %37 = vector.broadcast %cst_18 : f32 to vector<1x512xf32>
    %38 = arith.cmpf oge, %1, %37 : vector<1x512xf32>
    %39 = arith.extui %38 : vector<1x512xi1> to vector<1x512xi32>
    %40 = arith.sitofp %39 : vector<1x512xi32> to vector<1x512xf32>
    %41 = vector.extract_strided_slice %16 {offsets = [0, 2], sizes = [32, 1], strides = [1, 1]} : vector<32x16xf32> to vector<32x1xf32>
    %42 = vector.broadcast %41 : vector<32x1xf32> to vector<32x512xf32>
    %43 = arith.mulf %36, %42 : vector<32x512xf32>
    %44 = vector.broadcast %40 : vector<1x512xf32> to vector<32x512xf32>
    %45 = arith.mulf %43, %44 : vector<32x512xf32>
    %46 = arith.addf %33, %45 : vector<32x512xf32>
    %47 = vector.extract_strided_slice %14 {offsets = [0, 509], sizes = [32, 3], strides = [1, 1]} : vector<32x512xf32> to vector<32x3xf32>
    %48 = vector.extract_strided_slice %14 {offsets = [0, 0], sizes = [32, 509], strides = [1, 1]} : vector<32x512xf32> to vector<32x509xf32>
    %49 = tpu.concatenate %47, %48 in 1 : vector<32x3xf32>, vector<32x509xf32> -> vector<32x512xf32>
    %cst_19 = arith.constant 3.000000e+00 : f32
    %50 = vector.broadcast %cst_19 : f32 to vector<1x512xf32>
    %51 = arith.cmpf oge, %1, %50 : vector<1x512xf32>
    %52 = arith.extui %51 : vector<1x512xi1> to vector<1x512xi32>
    %53 = arith.sitofp %52 : vector<1x512xi32> to vector<1x512xf32>
    %54 = vector.extract_strided_slice %16 {offsets = [0, 3], sizes = [32, 1], strides = [1, 1]} : vector<32x16xf32> to vector<32x1xf32>
    %55 = vector.broadcast %54 : vector<32x1xf32> to vector<32x512xf32>
    %56 = arith.mulf %49, %55 : vector<32x512xf32>
    %57 = vector.broadcast %53 : vector<1x512xf32> to vector<32x512xf32>
    %58 = arith.mulf %56, %57 : vector<32x512xf32>
    %59 = arith.addf %46, %58 : vector<32x512xf32>
    %60 = vector.extract_strided_slice %14 {offsets = [0, 508], sizes = [32, 4], strides = [1, 1]} : vector<32x512xf32> to vector<32x4xf32>
    %61 = vector.extract_strided_slice %14 {offsets = [0, 0], sizes = [32, 508], strides = [1, 1]} : vector<32x512xf32> to vector<32x508xf32>
    %62 = tpu.concatenate %60, %61 in 1 : vector<32x4xf32>, vector<32x508xf32> -> vector<32x512xf32>
    %cst_20 = arith.constant 4.000000e+00 : f32
    %63 = vector.broadcast %cst_20 : f32 to vector<1x512xf32>
    %64 = arith.cmpf oge, %1, %63 : vector<1x512xf32>
    %65 = arith.extui %64 : vector<1x512xi1> to vector<1x512xi32>
    %66 = arith.sitofp %65 : vector<1x512xi32> to vector<1x512xf32>
    %67 = vector.extract_strided_slice %16 {offsets = [0, 4], sizes = [32, 1], strides = [1, 1]} : vector<32x16xf32> to vector<32x1xf32>
    %68 = vector.broadcast %67 : vector<32x1xf32> to vector<32x512xf32>
    %69 = arith.mulf %62, %68 : vector<32x512xf32>
    %70 = vector.broadcast %66 : vector<1x512xf32> to vector<32x512xf32>
    %71 = arith.mulf %69, %70 : vector<32x512xf32>
    %72 = arith.addf %59, %71 : vector<32x512xf32>
    %73 = vector.extract_strided_slice %14 {offsets = [0, 507], sizes = [32, 5], strides = [1, 1]} : vector<32x512xf32> to vector<32x5xf32>
    %74 = vector.extract_strided_slice %14 {offsets = [0, 0], sizes = [32, 507], strides = [1, 1]} : vector<32x512xf32> to vector<32x507xf32>
    %75 = tpu.concatenate %73, %74 in 1 : vector<32x5xf32>, vector<32x507xf32> -> vector<32x512xf32>
    %cst_21 = arith.constant 5.000000e+00 : f32
    %76 = vector.broadcast %cst_21 : f32 to vector<1x512xf32>
    %77 = arith.cmpf oge, %1, %76 : vector<1x512xf32>
    %78 = arith.extui %77 : vector<1x512xi1> to vector<1x512xi32>
    %79 = arith.sitofp %78 : vector<1x512xi32> to vector<1x512xf32>
    %80 = vector.extract_strided_slice %16 {offsets = [0, 5], sizes = [32, 1], strides = [1, 1]} : vector<32x16xf32> to vector<32x1xf32>
    %81 = vector.broadcast %80 : vector<32x1xf32> to vector<32x512xf32>
    %82 = arith.mulf %75, %81 : vector<32x512xf32>
    %83 = vector.broadcast %79 : vector<1x512xf32> to vector<32x512xf32>
    %84 = arith.mulf %82, %83 : vector<32x512xf32>
    %85 = arith.addf %72, %84 : vector<32x512xf32>
    %86 = vector.extract_strided_slice %14 {offsets = [0, 506], sizes = [32, 6], strides = [1, 1]} : vector<32x512xf32> to vector<32x6xf32>
    %87 = vector.extract_strided_slice %14 {offsets = [0, 0], sizes = [32, 506], strides = [1, 1]} : vector<32x512xf32> to vector<32x506xf32>
    %88 = tpu.concatenate %86, %87 in 1 : vector<32x6xf32>, vector<32x506xf32> -> vector<32x512xf32>
    %cst_22 = arith.constant 6.000000e+00 : f32
    %89 = vector.broadcast %cst_22 : f32 to vector<1x512xf32>
    %90 = arith.cmpf oge, %1, %89 : vector<1x512xf32>
    %91 = arith.extui %90 : vector<1x512xi1> to vector<1x512xi32>
    %92 = arith.sitofp %91 : vector<1x512xi32> to vector<1x512xf32>
    %93 = vector.extract_strided_slice %16 {offsets = [0, 6], sizes = [32, 1], strides = [1, 1]} : vector<32x16xf32> to vector<32x1xf32>
    %94 = vector.broadcast %93 : vector<32x1xf32> to vector<32x512xf32>
    %95 = arith.mulf %88, %94 : vector<32x512xf32>
    %96 = vector.broadcast %92 : vector<1x512xf32> to vector<32x512xf32>
    %97 = arith.mulf %95, %96 : vector<32x512xf32>
    %98 = arith.addf %85, %97 : vector<32x512xf32>
    %99 = vector.extract_strided_slice %14 {offsets = [0, 505], sizes = [32, 7], strides = [1, 1]} : vector<32x512xf32> to vector<32x7xf32>
    %100 = vector.extract_strided_slice %14 {offsets = [0, 0], sizes = [32, 505], strides = [1, 1]} : vector<32x512xf32> to vector<32x505xf32>
    %101 = tpu.concatenate %99, %100 in 1 : vector<32x7xf32>, vector<32x505xf32> -> vector<32x512xf32>
    %cst_23 = arith.constant 7.000000e+00 : f32
    %102 = vector.broadcast %cst_23 : f32 to vector<1x512xf32>
    %103 = arith.cmpf oge, %1, %102 : vector<1x512xf32>
    %104 = arith.extui %103 : vector<1x512xi1> to vector<1x512xi32>
    %105 = arith.sitofp %104 : vector<1x512xi32> to vector<1x512xf32>
    %106 = vector.extract_strided_slice %16 {offsets = [0, 7], sizes = [32, 1], strides = [1, 1]} : vector<32x16xf32> to vector<32x1xf32>
    %107 = vector.broadcast %106 : vector<32x1xf32> to vector<32x512xf32>
    %108 = arith.mulf %101, %107 : vector<32x512xf32>
    %109 = vector.broadcast %105 : vector<1x512xf32> to vector<32x512xf32>
    %110 = arith.mulf %108, %109 : vector<32x512xf32>
    %111 = arith.addf %98, %110 : vector<32x512xf32>
    %112 = vector.extract_strided_slice %14 {offsets = [0, 504], sizes = [32, 8], strides = [1, 1]} : vector<32x512xf32> to vector<32x8xf32>
    %113 = vector.extract_strided_slice %14 {offsets = [0, 0], sizes = [32, 504], strides = [1, 1]} : vector<32x512xf32> to vector<32x504xf32>
    %114 = tpu.concatenate %112, %113 in 1 : vector<32x8xf32>, vector<32x504xf32> -> vector<32x512xf32>
    %cst_24 = arith.constant 8.000000e+00 : f32
    %115 = vector.broadcast %cst_24 : f32 to vector<1x512xf32>
    %116 = arith.cmpf oge, %1, %115 : vector<1x512xf32>
    %117 = arith.extui %116 : vector<1x512xi1> to vector<1x512xi32>
    %118 = arith.sitofp %117 : vector<1x512xi32> to vector<1x512xf32>
    %119 = vector.extract_strided_slice %16 {offsets = [0, 8], sizes = [32, 1], strides = [1, 1]} : vector<32x16xf32> to vector<32x1xf32>
    %120 = vector.broadcast %119 : vector<32x1xf32> to vector<32x512xf32>
    %121 = arith.mulf %114, %120 : vector<32x512xf32>
    %122 = vector.broadcast %118 : vector<1x512xf32> to vector<32x512xf32>
    %123 = arith.mulf %121, %122 : vector<32x512xf32>
    %124 = arith.addf %111, %123 : vector<32x512xf32>
    %125 = vector.extract_strided_slice %14 {offsets = [0, 503], sizes = [32, 9], strides = [1, 1]} : vector<32x512xf32> to vector<32x9xf32>
    %126 = vector.extract_strided_slice %14 {offsets = [0, 0], sizes = [32, 503], strides = [1, 1]} : vector<32x512xf32> to vector<32x503xf32>
    %127 = tpu.concatenate %125, %126 in 1 : vector<32x9xf32>, vector<32x503xf32> -> vector<32x512xf32>
    %cst_25 = arith.constant 9.000000e+00 : f32
    %128 = vector.broadcast %cst_25 : f32 to vector<1x512xf32>
    %129 = arith.cmpf oge, %1, %128 : vector<1x512xf32>
    %130 = arith.extui %129 : vector<1x512xi1> to vector<1x512xi32>
    %131 = arith.sitofp %130 : vector<1x512xi32> to vector<1x512xf32>
    %132 = vector.extract_strided_slice %16 {offsets = [0, 9], sizes = [32, 1], strides = [1, 1]} : vector<32x16xf32> to vector<32x1xf32>
    %133 = vector.broadcast %132 : vector<32x1xf32> to vector<32x512xf32>
    %134 = arith.mulf %127, %133 : vector<32x512xf32>
    %135 = vector.broadcast %131 : vector<1x512xf32> to vector<32x512xf32>
    %136 = arith.mulf %134, %135 : vector<32x512xf32>
    %137 = arith.addf %124, %136 : vector<32x512xf32>
    %138 = vector.extract_strided_slice %14 {offsets = [0, 502], sizes = [32, 10], strides = [1, 1]} : vector<32x512xf32> to vector<32x10xf32>
    %139 = vector.extract_strided_slice %14 {offsets = [0, 0], sizes = [32, 502], strides = [1, 1]} : vector<32x512xf32> to vector<32x502xf32>
    %140 = tpu.concatenate %138, %139 in 1 : vector<32x10xf32>, vector<32x502xf32> -> vector<32x512xf32>
    %cst_26 = arith.constant 1.000000e+01 : f32
    %141 = vector.broadcast %cst_26 : f32 to vector<1x512xf32>
    %142 = arith.cmpf oge, %1, %141 : vector<1x512xf32>
    %143 = arith.extui %142 : vector<1x512xi1> to vector<1x512xi32>
    %144 = arith.sitofp %143 : vector<1x512xi32> to vector<1x512xf32>
    %145 = vector.extract_strided_slice %16 {offsets = [0, 10], sizes = [32, 1], strides = [1, 1]} : vector<32x16xf32> to vector<32x1xf32>
    %146 = vector.broadcast %145 : vector<32x1xf32> to vector<32x512xf32>
    %147 = arith.mulf %140, %146 : vector<32x512xf32>
    %148 = vector.broadcast %144 : vector<1x512xf32> to vector<32x512xf32>
    %149 = arith.mulf %147, %148 : vector<32x512xf32>
    %150 = arith.addf %137, %149 : vector<32x512xf32>
    %151 = vector.extract_strided_slice %14 {offsets = [0, 501], sizes = [32, 11], strides = [1, 1]} : vector<32x512xf32> to vector<32x11xf32>
    %152 = vector.extract_strided_slice %14 {offsets = [0, 0], sizes = [32, 501], strides = [1, 1]} : vector<32x512xf32> to vector<32x501xf32>
    %153 = tpu.concatenate %151, %152 in 1 : vector<32x11xf32>, vector<32x501xf32> -> vector<32x512xf32>
    %cst_27 = arith.constant 1.100000e+01 : f32
    %154 = vector.broadcast %cst_27 : f32 to vector<1x512xf32>
    %155 = arith.cmpf oge, %1, %154 : vector<1x512xf32>
    %156 = arith.extui %155 : vector<1x512xi1> to vector<1x512xi32>
    %157 = arith.sitofp %156 : vector<1x512xi32> to vector<1x512xf32>
    %158 = vector.extract_strided_slice %16 {offsets = [0, 11], sizes = [32, 1], strides = [1, 1]} : vector<32x16xf32> to vector<32x1xf32>
    %159 = vector.broadcast %158 : vector<32x1xf32> to vector<32x512xf32>
    %160 = arith.mulf %153, %159 : vector<32x512xf32>
    %161 = vector.broadcast %157 : vector<1x512xf32> to vector<32x512xf32>
    %162 = arith.mulf %160, %161 : vector<32x512xf32>
    %163 = arith.addf %150, %162 : vector<32x512xf32>
    %164 = vector.extract_strided_slice %14 {offsets = [0, 500], sizes = [32, 12], strides = [1, 1]} : vector<32x512xf32> to vector<32x12xf32>
    %165 = vector.extract_strided_slice %14 {offsets = [0, 0], sizes = [32, 500], strides = [1, 1]} : vector<32x512xf32> to vector<32x500xf32>
    %166 = tpu.concatenate %164, %165 in 1 : vector<32x12xf32>, vector<32x500xf32> -> vector<32x512xf32>
    %cst_28 = arith.constant 1.200000e+01 : f32
    %167 = vector.broadcast %cst_28 : f32 to vector<1x512xf32>
    %168 = arith.cmpf oge, %1, %167 : vector<1x512xf32>
    %169 = arith.extui %168 : vector<1x512xi1> to vector<1x512xi32>
    %170 = arith.sitofp %169 : vector<1x512xi32> to vector<1x512xf32>
    %171 = vector.extract_strided_slice %16 {offsets = [0, 12], sizes = [32, 1], strides = [1, 1]} : vector<32x16xf32> to vector<32x1xf32>
    %172 = vector.broadcast %171 : vector<32x1xf32> to vector<32x512xf32>
    %173 = arith.mulf %166, %172 : vector<32x512xf32>
    %174 = vector.broadcast %170 : vector<1x512xf32> to vector<32x512xf32>
    %175 = arith.mulf %173, %174 : vector<32x512xf32>
    %176 = arith.addf %163, %175 : vector<32x512xf32>
    %177 = vector.extract_strided_slice %14 {offsets = [0, 499], sizes = [32, 13], strides = [1, 1]} : vector<32x512xf32> to vector<32x13xf32>
    %178 = vector.extract_strided_slice %14 {offsets = [0, 0], sizes = [32, 499], strides = [1, 1]} : vector<32x512xf32> to vector<32x499xf32>
    %179 = tpu.concatenate %177, %178 in 1 : vector<32x13xf32>, vector<32x499xf32> -> vector<32x512xf32>
    %cst_29 = arith.constant 1.300000e+01 : f32
    %180 = vector.broadcast %cst_29 : f32 to vector<1x512xf32>
    %181 = arith.cmpf oge, %1, %180 : vector<1x512xf32>
    %182 = arith.extui %181 : vector<1x512xi1> to vector<1x512xi32>
    %183 = arith.sitofp %182 : vector<1x512xi32> to vector<1x512xf32>
    %184 = vector.extract_strided_slice %16 {offsets = [0, 13], sizes = [32, 1], strides = [1, 1]} : vector<32x16xf32> to vector<32x1xf32>
    %185 = vector.broadcast %184 : vector<32x1xf32> to vector<32x512xf32>
    %186 = arith.mulf %179, %185 : vector<32x512xf32>
    %187 = vector.broadcast %183 : vector<1x512xf32> to vector<32x512xf32>
    %188 = arith.mulf %186, %187 : vector<32x512xf32>
    %189 = arith.addf %176, %188 : vector<32x512xf32>
    %190 = vector.extract_strided_slice %14 {offsets = [0, 498], sizes = [32, 14], strides = [1, 1]} : vector<32x512xf32> to vector<32x14xf32>
    %191 = vector.extract_strided_slice %14 {offsets = [0, 0], sizes = [32, 498], strides = [1, 1]} : vector<32x512xf32> to vector<32x498xf32>
    %192 = tpu.concatenate %190, %191 in 1 : vector<32x14xf32>, vector<32x498xf32> -> vector<32x512xf32>
    %cst_30 = arith.constant 1.400000e+01 : f32
    %193 = vector.broadcast %cst_30 : f32 to vector<1x512xf32>
    %194 = arith.cmpf oge, %1, %193 : vector<1x512xf32>
    %195 = arith.extui %194 : vector<1x512xi1> to vector<1x512xi32>
    %196 = arith.sitofp %195 : vector<1x512xi32> to vector<1x512xf32>
    %197 = vector.extract_strided_slice %16 {offsets = [0, 14], sizes = [32, 1], strides = [1, 1]} : vector<32x16xf32> to vector<32x1xf32>
    %198 = vector.broadcast %197 : vector<32x1xf32> to vector<32x512xf32>
    %199 = arith.mulf %192, %198 : vector<32x512xf32>
    %200 = vector.broadcast %196 : vector<1x512xf32> to vector<32x512xf32>
    %201 = arith.mulf %199, %200 : vector<32x512xf32>
    %202 = arith.addf %189, %201 : vector<32x512xf32>
    %203 = vector.extract_strided_slice %14 {offsets = [0, 497], sizes = [32, 15], strides = [1, 1]} : vector<32x512xf32> to vector<32x15xf32>
    %204 = vector.extract_strided_slice %14 {offsets = [0, 0], sizes = [32, 497], strides = [1, 1]} : vector<32x512xf32> to vector<32x497xf32>
    %205 = tpu.concatenate %203, %204 in 1 : vector<32x15xf32>, vector<32x497xf32> -> vector<32x512xf32>
    %cst_31 = arith.constant 1.500000e+01 : f32
    %206 = vector.broadcast %cst_31 : f32 to vector<1x512xf32>
    %207 = arith.cmpf oge, %1, %206 : vector<1x512xf32>
    %208 = arith.extui %207 : vector<1x512xi1> to vector<1x512xi32>
    %209 = arith.sitofp %208 : vector<1x512xi32> to vector<1x512xf32>
    %210 = vector.extract_strided_slice %16 {offsets = [0, 15], sizes = [32, 1], strides = [1, 1]} : vector<32x16xf32> to vector<32x1xf32>
    %211 = vector.broadcast %210 : vector<32x1xf32> to vector<32x512xf32>
    %212 = arith.mulf %205, %211 : vector<32x512xf32>
    %213 = vector.broadcast %209 : vector<1x512xf32> to vector<32x512xf32>
    %214 = arith.mulf %212, %213 : vector<32x512xf32>
    %215 = arith.addf %202, %214 : vector<32x512xf32>
    %c0_32 = arith.constant 0 : index
    %c0_33 = arith.constant 0 : index
    %c0_34 = arith.constant 0 : index
    %216 = vector.load %arg7[%c0_32, %c0_33, %c0_34] : memref<1x32x512xf32, #tpu.memory_space<vmem>>, vector<1x32x512xf32>
    %217 = vector.shape_cast %216 : vector<1x32x512xf32> to vector<32x512xf32>
    %218 = vector.shape_cast %215 : vector<32x512xf32> to vector<1x32x512xf32>
    tpu.vector_store %arg7[%c0_32, %c0_33, %c0_34], %218 {strides = array<i32>} : memref<1x32x512xf32, #tpu.memory_space<vmem>>, vector<1x32x512xf32>,
    return
  }
  func.func @transform_0(%arg0: i32) -> (i32, i32) {
    %c0_i32 = arith.constant 0 : i32
    %c0_i32_0 = arith.constant 0 : i32
    %c0_i32_1 = arith.constant 0 : i32
    return %c0_i32, %c0_i32_0 : i32, i32
  }
  func.func @transform_1(%arg0: i32) -> (i32, i32) {
    %c0_i32 = arith.constant 0 : i32
    %c0_i32_0 = arith.constant 0 : i32
    %c0_i32_1 = arith.constant 0 : i32
    return %c0_i32, %c0_i32_0 : i32, i32
  }
  func.func @transform_2(%arg0: i32) -> (i32, i32, i32) {
    %c0_i32 = arith.constant 0 : i32
    %c0_i32_0 = arith.constant 0 : i32
    %c0_i32_1 = arith.constant 0 : i32
    return %arg0, %c0_i32, %c0_i32_0 : i32, i32, i32
  }
  func.func @transform_3(%arg0: i32) -> (i32, i32, i32) {
    %c0_i32 = arith.constant 0 : i32
    %c0_i32_0 = arith.constant 0 : i32
    %c0_i32_1 = arith.constant 0 : i32
    return %arg0, %c0_i32, %c0_i32_0 : i32, i32, i32
  }
  func.func @transform_4(%arg0: i32) -> (i32, i32, i32) {
    %c0_i32 = arith.constant 0 : i32
    %c0_i32_0 = arith.constant 0 : i32
    %c0_i32_1 = arith.constant 0 : i32
    return %arg0, %c0_i32, %c0_i32_0 : i32, i32, i32
  }
  func.func @transform_5(%arg0: i32) -> (i32, i32, i32) {
    %c0_i32 = arith.constant 0 : i32
    %c0_i32_0 = arith.constant 0 : i32
    %c0_i32_1 = arith.constant 0 : i32
    return %arg0, %c0_i32, %c0_i32_0 : i32, i32, i32
  }
  func.func @transform_6(%arg0: i32) -> (i32, i32, i32) {
    %c0_i32 = arith.constant 0 : i32
    %c0_i32_0 = arith.constant 0 : i32
    %c0_i32_1 = arith.constant 0 : i32
    return %arg0, %c0_i32, %c0_i32_0 : i32, i32, i32
  }
}

</mosaic_0001>

<llo_original>
// kernel: tpu_custom_call.1
$region0: #{tpu_custom_call.1}
  #allocation0 [shape = 'u32[]', space=smem, size = 0x4, offset = 0x4, fixed_abs, tag = 'smem constant byte address 0x4 - core index']
  #allocation1 [shape = 'u32[144,128]{1,0:T(1,128)}', space=vmem, size = 0x12000, scoped, tag = 'internal scratch']
  %s0 = inlined_call_operand.hbm [shape: f32[1,512], index: 0, kind: input, shape index: {}]
  %s1 = inlined_call_operand.vmem [shape: bf16[32,512], index: 1, kind: input, shape index: {}]
  %s2 = inlined_call_operand.vmem [shape: bf16[2,32,32], index: 2, kind: input, shape index: {}]
  %s3 = inlined_call_operand.vmem [shape: f32[2,32,1], index: 3, kind: input, shape index: {}]
  %s4 = inlined_call_operand.vmem [shape: bf16[2,32,32], index: 4, kind: input, shape index: {}]
  %s5 = inlined_call_operand.vmem [shape: f32[2,32,16], index: 5, kind: input, shape index: {}]
  %s6 = inlined_call_operand.hbm [shape: f32[2,32,512], index: 6, kind: output, shape index: {}]
  %s7 = sld [smem:[#allocation0]]
  $region61: #{tpu_custom_call.1} parent=0
    _
  %s9 = ssub.s32 1, %s7
  %s10 = scalar_select 0, %s9, %s7
  $region1: #{tpu_custom_call.1} parent=0
    #allocation2 [shape = 'u8[2048]{0}', space=vmem, size = 0x800, scoped, tag = 'input window, operand 0, single buffered']
    #allocation3 [shape = 's32[2]{0}', space=sflag, size = 0x8, scoped, tag = 'scoped memory for tpu_custom_call.1']
    #allocation4 [shape = 's32[2]{0}', space=sflag, size = 0x8, scoped, tag = 'scoped memory for tpu_custom_call.1']
    #allocation5 [shape = 'u8[131072]{0}', space=vmem, size = 0x20000, scoped, tag = 'output window, operand 0']
    %11 = vsyncpa [#allocation3], 0
    %12 = vsyncpa [#allocation4], 0
    %s13 = scalar_lea.sflag [#allocation4], 1
    %14 = vsyncpa %s13, 0
    loop: start=0, step=1, limit=4
    $region2: #{tpu_custom_call.1} parent=1 // loop_pre_header
      _
    $region3: #{tpu_custom_call.1} parent=1 // loop_header
      %s16 = sphi 0, %s20
      %p17 = scmp.ge.s32.totalorder %s16, 4
      %s24 = sphi 0, %s24
      %s26 = sphi 0, %s24
      %s27 = sphi 0, %s26
      %s41 = sphi 0, %s27
      %s45 = sphi 0, %s45
      %s47 = sphi 0, %s45
      %s48 = sphi 0, %s47
      %s62 = sphi 0, %s48
      %s68 = sphi 0, %s70
      %s71 = sphi 0, %s68
      %s72 = sphi 0, %s71
      %s88 = sphi 0, %s72
      %s94 = sphi 0, %s96
      %s97 = sphi 0, %s94
      %s98 = sphi 0, %s97
      %s114 = sphi 0, %s98
      %s120 = sphi 0, %s122
      %s123 = sphi 0, %s120
      %s124 = sphi 0, %s123
      %s140 = sphi 0, %s124
      %s146 = sphi 0, %s148
      %s149 = sphi 0, %s146
      %s150 = sphi 0, %s149
      %s166 = sphi 0, %s150
      %s172 = sphi 0, %s174
      %s175 = sphi 0, %s172
      %s176 = sphi 0, %s175
      %s192 = sphi 0, %s176
    $region4: #{tpu_custom_call.1} parent=1 // loop_header_branch
      %19 = sbr.rel (%p17) target = $region8
    $region5: #{tpu_custom_call.1} parent=1 // loop_body
      %s21 = ssub.s32 %s16, 1
      %s22 = ssub.s32 %s16, 2
      %s23 = sadd.s32 %s16, 1
      %s25 = sadd.s32 %s24, 1
      %p28 = scmp.eq.s32.totalorder %s16, 1
      %p29 = scmp.ne.s32.totalorder %s24, %s26
      %p30 = scmp.eq.s32.totalorder %s16, 0
      %p31 = por %p29, %p30
      %p32 = scmp.ne.s32.totalorder %s24, %s26
      %p33 = scmp.eq.s32.totalorder %s21, 1
      %p34 = por %p32, %p33
      %p35 = scmp.ne.s32.totalorder %s26, %s27
      %p36 = scmp.eq.s32.totalorder %s21, 0
      %p37 = por %p35, %p36
      %p38 = scmp.ne.s32.totalorder %s26, %s27
      %p39 = scmp.eq.s32.totalorder %s22, 1
      %p40 = por %p38, %p39
      %p42 = scmp.ne.s32.totalorder %s27, %s41
      %p43 = scmp.eq.s32.totalorder %s22, 0
      %p44 = por %p42, %p43
      %s46 = sadd.s32 %s45, 1
      %p49 = scmp.eq.s32.totalorder %s16, 1
      %p50 = scmp.ne.s32.totalorder %s45, %s47
      %p51 = scmp.eq.s32.totalorder %s16, 0
      %p52 = por %p50, %p51
      %p53 = scmp.ne.s32.totalorder %s45, %s47
      %p54 = scmp.eq.s32.totalorder %s21, 1
      %p55 = por %p53, %p54
      %p56 = scmp.ne.s32.totalorder %s47, %s48
      %p57 = scmp.eq.s32.totalorder %s21, 0
      %p58 = por %p56, %p57
      %p59 = scmp.ne.s32.totalorder %s47, %s48
      %p60 = scmp.eq.s32.totalorder %s22, 1
      %p61 = por %p59, %p60
      %p63 = scmp.ne.s32.totalorder %s48, %s62
      %p64 = scmp.eq.s32.totalorder %s22, 0
      %p65 = por %p63, %p64
      %s66 = ssub.s32 %s16, %s23
      %p67 = scmp.eq.s32.totalorder %s66, 0
      %s69 = sadd.s32 %s68, 1
      %s70 = scalar_select %p67, %s68, %s69
      %p73 = pneg %p67
      %p74 = scmp.eq.s32.totalorder %s16, 1
      %p75 = por %p73, %p74
      %p76 = scmp.ne.s32.totalorder %s68, %s71
      %p77 = scmp.eq.s32.totalorder %s16, 0
      %p78 = por %p76, %p77
      %p79 = scmp.ne.s32.totalorder %s68, %s71
      %p80 = scmp.eq.s32.totalorder %s21, 1
      %p81 = por %p79, %p80
      %p82 = scmp.ne.s32.totalorder %s71, %s72
      %p83 = scmp.eq.s32.totalorder %s21, 0
      %p84 = por %p82, %p83
      %p85 = scmp.ne.s32.totalorder %s71, %s72
      %p86 = scmp.eq.s32.totalorder %s22, 1
      %p87 = por %p85, %p86
      %p89 = scmp.ne.s32.totalorder %s72, %s88
      %p90 = scmp.eq.s32.totalorder %s22, 0
      %p91 = por %p89, %p90
      %s92 = ssub.s32 %s16, %s23
      %p93 = scmp.eq.s32.totalorder %s92, 0
      %s95 = sadd.s32 %s94, 1
      %s96 = scalar_select %p93, %s94, %s95
      %p99 = pneg %p93
      %p100 = scmp.eq.s32.totalorder %s16, 1
      %p101 = por %p99, %p100
      %p102 = scmp.ne.s32.totalorder %s94, %s97
      %p103 = scmp.eq.s32.totalorder %s16, 0
      %p104 = por %p102, %p103
      %p105 = scmp.ne.s32.totalorder %s94, %s97
      %p106 = scmp.eq.s32.totalorder %s21, 1
      %p107 = por %p105, %p106
      %p108 = scmp.ne.s32.totalorder %s97, %s98
      %p109 = scmp.eq.s32.totalorder %s21, 0
      %p110 = por %p108, %p109
      %p111 = scmp.ne.s32.totalorder %s97, %s98
      %p112 = scmp.eq.s32.totalorder %s22, 1
      %p113 = por %p111, %p112
      %p115 = scmp.ne.s32.totalorder %s98, %s114
      %p116 = scmp.eq.s32.totalorder %s22, 0
      %p117 = por %p115, %p116
      %s118 = ssub.s32 %s16, %s23
      %p119 = scmp.eq.s32.totalorder %s118, 0
      %s121 = sadd.s32 %s120, 1
      %s122 = scalar_select %p119, %s120, %s121
      %p125 = pneg %p119
      %p126 = scmp.eq.s32.totalorder %s16, 1
      %p127 = por %p125, %p126
      %p128 = scmp.ne.s32.totalorder %s120, %s123
      %p129 = scmp.eq.s32.totalorder %s16, 0
      %p130 = por %p128, %p129
      %p131 = scmp.ne.s32.totalorder %s120, %s123
      %p132 = scmp.eq.s32.totalorder %s21, 1
      %p133 = por %p131, %p132
      %p134 = scmp.ne.s32.totalorder %s123, %s124
      %p135 = scmp.eq.s32.totalorder %s21, 0
      %p136 = por %p134, %p135
      %p137 = scmp.ne.s32.totalorder %s123, %s124
      %p138 = scmp.eq.s32.totalorder %s22, 1
      %p139 = por %p137, %p138
      %p141 = scmp.ne.s32.totalorder %s124, %s140
      %p142 = scmp.eq.s32.totalorder %s22, 0
      %p143 = por %p141, %p142
      %s144 = ssub.s32 %s16, %s23
      %p145 = scmp.eq.s32.totalorder %s144, 0
      %s147 = sadd.s32 %s146, 1
      %s148 = scalar_select %p145, %s146, %s147
      %p151 = pneg %p145
      %p152 = scmp.eq.s32.totalorder %s16, 1
      %p153 = por %p151, %p152
      %p154 = scmp.ne.s32.totalorder %s146, %s149
      %p155 = scmp.eq.s32.totalorder %s16, 0
      %p156 = por %p154, %p155
      %p157 = scmp.ne.s32.totalorder %s146, %s149
      %p158 = scmp.eq.s32.totalorder %s21, 1
      %p159 = por %p157, %p158
      %p160 = scmp.ne.s32.totalorder %s149, %s150
      %p161 = scmp.eq.s32.totalorder %s21, 0
      %p162 = por %p160, %p161
      %p163 = scmp.ne.s32.totalorder %s149, %s150
      %p164 = scmp.eq.s32.totalorder %s22, 1
      %p165 = por %p163, %p164
      %p167 = scmp.ne.s32.totalorder %s150, %s166
      %p168 = scmp.eq.s32.totalorder %s22, 0
      %p169 = por %p167, %p168
      %s170 = ssub.s32 %s16, %s23
      %p171 = scmp.eq.s32.totalorder %s170, 0
      %s173 = sadd.s32 %s172, 1
      %s174 = scalar_select %p171, %s172, %s173
      %p177 = pneg %p171
      %p178 = scmp.eq.s32.totalorder %s16, 1
      %p179 = por %p177, %p178
      %p180 = scmp.ne.s32.totalorder %s172, %s175
      %p181 = scmp.eq.s32.totalorder %s16, 0
      %p182 = por %p180, %p181
      %p183 = scmp.ne.s32.totalorder %s172, %s175
      %p184 = scmp.eq.s32.totalorder %s21, 1
      %p185 = por %p183, %p184
      %p186 = scmp.ne.s32.totalorder %s175, %s176
      %p187 = scmp.eq.s32.totalorder %s21, 0
      %p188 = por %p186, %p187
      %p189 = scmp.ne.s32.totalorder %s175, %s176
      %p190 = scmp.eq.s32.totalorder %s22, 1
      %p191 = por %p189, %p190
      %p193 = scmp.ne.s32.totalorder %s176, %s192
      %p194 = scmp.eq.s32.totalorder %s22, 0
      %p195 = por %p193, %p194
      %p196 = scmp.le.s32.totalorder 1, %s16
      %p197 = scmp.lt.s32.totalorder %s16, 3
      %p198 = pnand %p196, %p197
      %p199 = pneg %p198
      // Predicated region
      $region9: #{tpu_custom_call.1} parent=5 // pred_check
        _
      $region10: #{tpu_custom_call.1} parent=5 // pred_check_branch
        %201 = sbr.rel (%p198) target = $region12
      $region11: #{tpu_custom_call.1} parent=5 // pred_region
        %s202 = ssub.s32 %s16, 1
        // Predicated region
        $region13: #{tpu_custom_call.1} parent=11 // pred_check
          %p203 = pneg %p37
        $region14: #{tpu_custom_call.1} parent=11 // pred_check_branch
          %205 = sbr.rel (%p203) target = $region16
        $region15: #{tpu_custom_call.1} parent=11 // pred_region
          %s207 = ssub.s32 64, 64
          %208 = vsyncadd [#allocation3], %s207
          %s210 = sshll.u32 [#allocation2], 4
          %s211 = int_to_ptr.vmem [resolvable:$true] %s210
          %213 = dma.hbm_to_vmem [thread:$0]  %s0, 64, %s211, [#allocation3]
        $region16: #{tpu_custom_call.1} parent=11 // pred_fallthru
          _
        // Predicated region
        $region17: #{tpu_custom_call.1} parent=11 // pred_check
          %p214 = pneg %p58
        $region18: #{tpu_custom_call.1} parent=11 // pred_check_branch
          %216 = sbr.rel (%p214) target = $region20
        $region19: #{tpu_custom_call.1} parent=11 // pred_region
          _
        $region20: #{tpu_custom_call.1} parent=11 // pred_fallthru
          _
      $region12: #{tpu_custom_call.1} parent=5 // pred_fallthru
        _
      %p217 = scmp.lt.s32.totalorder %s16, 2
      // Predicated region
      $region21: #{tpu_custom_call.1} parent=5 // pred_check
        %p218 = pneg %p217
      $region22: #{tpu_custom_call.1} parent=5 // pred_check_branch
        %220 = sbr.rel (%p218) target = $region24
      $region23: #{tpu_custom_call.1} parent=5 // pred_region
        // Predicated region
        $region25: #{tpu_custom_call.1} parent=23 // pred_check
          %p221 = pneg %p78
        $region26: #{tpu_custom_call.1} parent=23 // pred_check_branch
          %223 = sbr.rel (%p221) target = $region28
        $region27: #{tpu_custom_call.1} parent=23 // pred_region
          %p224 = scmp.lt.s32.totalorder %s16, 1
          %s225 = scalar_select %p224, %s16, 1
          %s226 = smul.addr %s225, 4
          %s227 = smul.addr %s226, 4
          %s228 = scalar_lea.vmem %s2, %s227
        $region28: #{tpu_custom_call.1} parent=23 // pred_fallthru
          _
        // Predicated region
        $region29: #{tpu_custom_call.1} parent=23 // pred_check
          %p229 = pneg %p104
        $region30: #{tpu_custom_call.1} parent=23 // pred_check_branch
          %231 = sbr.rel (%p229) target = $region32
        $region31: #{tpu_custom_call.1} parent=23 // pred_region
          %p232 = scmp.lt.s32.totalorder %s16, 1
          %s233 = scalar_select %p232, %s16, 1
          %s234 = smul.addr %s233, 4
          %s235 = smul.addr %s234, 8
          %s236 = scalar_lea.vmem %s3, %s235
        $region32: #{tpu_custom_call.1} parent=23 // pred_fallthru
          _
        // Predicated region
        $region33: #{tpu_custom_call.1} parent=23 // pred_check
          %p237 = pneg %p130
        $region34: #{tpu_custom_call.1} parent=23 // pred_check_branch
          %239 = sbr.rel (%p237) target = $region36
        $region35: #{tpu_custom_call.1} parent=23 // pred_region
          %p240 = scmp.lt.s32.totalorder %s16, 1
          %s241 = scalar_select %p240, %s16, 1
          %s242 = smul.addr %s241, 4
          %s243 = smul.addr %s242, 4
          %s244 = scalar_lea.vmem %s4, %s243
        $region36: #{tpu_custom_call.1} parent=23 // pred_fallthru
          _
        // Predicated region
        $region37: #{tpu_custom_call.1} parent=23 // pred_check
          %p245 = pneg %p156
        $region38: #{tpu_custom_call.1} parent=23 // pred_check_branch
          %247 = sbr.rel (%p245) target = $region40
        $region39: #{tpu_custom_call.1} parent=23 // pred_region
          %p248 = scmp.lt.s32.totalorder %s16, 1
          %s249 = scalar_select %p248, %s16, 1
          %s250 = smul.addr %s249, 4
          %s251 = smul.addr %s250, 8
          %s252 = scalar_lea.vmem %s5, %s251
        $region40: #{tpu_custom_call.1} parent=23 // pred_fallthru
          _
      $region24: #{tpu_custom_call.1} parent=5 // pred_fallthru
        _
      %p253 = scmp.le.s32.totalorder 1, %s16
      %p254 = scmp.lt.s32.totalorder %s16, 3
      %p255 = pnand %p253, %p254
      %p256 = pneg %p255
      // Predicated region
      $region41: #{tpu_custom_call.1} parent=5 // pred_check
        _
      $region42: #{tpu_custom_call.1} parent=5 // pred_check_branch
        %258 = sbr.rel (%p255) target = $region44
      $region43: #{tpu_custom_call.1} parent=5 // pred_region
        %s259 = ssub.s32 %s16, 1
        // Predicated region
        $region45: #{tpu_custom_call.1} parent=43 // pred_check
          %p260 = pneg %p37
        $region46: #{tpu_custom_call.1} parent=43 // pred_check_branch
          %262 = sbr.rel (%p260) target = $region48
        $region47: #{tpu_custom_call.1} parent=43 // pred_region
          %263 = dma.done [#allocation3], 64
        $region48: #{tpu_custom_call.1} parent=43 // pred_fallthru
          _
        %p264 = pneg %p37
        %p265 = pneg %p34
        %p266 = pneg %p58
        %p267 = pneg %p55
        %p268 = scmp.lt.s32.totalorder %s21, 1
        %s269 = scalar_select %p268, %s21, 1
        %s270 = smul.addr %s269, 4
        %s271 = smul.addr %s270, 4
        %s272 = scalar_lea.vmem %s2, %s271
        %p273 = pneg %p84
        %p274 = pneg %p81
        %p275 = scmp.lt.s32.totalorder %s21, 1
        %s276 = scalar_select %p275, %s21, 1
        %s277 = smul.addr %s276, 4
        %s278 = smul.addr %s277, 8
        %s279 = scalar_lea.vmem %s3, %s278
        %p280 = pneg %p110
        %p281 = pneg %p107
        %p282 = scmp.lt.s32.totalorder %s21, 1
        %s283 = scalar_select %p282, %s21, 1
        %s284 = smul.addr %s283, 4
        %s285 = smul.addr %s284, 4
        %s286 = scalar_lea.vmem %s4, %s285
        %p287 = pneg %p136
        %p288 = pneg %p133
        %p289 = scmp.lt.s32.totalorder %s21, 1
        %s290 = scalar_select %p289, %s21, 1
        %s291 = smul.addr %s290, 4
        %s292 = smul.addr %s291, 8
        %s293 = scalar_lea.vmem %s5, %s292
        %p294 = pneg %p162
        %p295 = pneg %p159
        %p296 = pneg %p188
        %p297 = pneg %p185
        %s298 = sand.u32 %s175, 1
        %s299 = scalar_lea.sflag [#allocation4], %s298
        %s300 = sand.u32 %s175, 1
        %s301 = smul.addr %s300, 128
        %s302 = scalar_lea.vmem [#allocation5], %s301
        %p303 = scmp.lt.s32.totalorder %s21, 1
        %s304 = scalar_select %p303, %s21, 1
        %s305 = smul.addr %s304, 4
        %s306 = smul.addr %s305, 4
        %s307 = scalar_lea.vmem %s2, %s306
        %p308 = scmp.lt.s32.totalorder %s21, 1
        %s309 = scalar_select %p308, %s21, 1
        %s310 = smul.addr %s309, 4
        %s311 = smul.addr %s310, 8
        %s312 = scalar_lea.vmem %s3, %s311
        %p313 = scmp.lt.s32.totalorder %s21, 1
        %s314 = scalar_select %p313, %s21, 1
        %s315 = smul.addr %s314, 4
        %s316 = smul.addr %s315, 4
        %s317 = scalar_lea.vmem %s4, %s316
        %p318 = scmp.lt.s32.totalorder %s21, 1
        %s319 = scalar_select %p318, %s21, 1
        %s320 = smul.addr %s319, 4
        %s321 = smul.addr %s320, 8
        %s322 = scalar_lea.vmem %s5, %s321
        %v324 = vld [vmem:[%s1] sm:$0xff]
        %v325 = vld [vmem:[%s1 + $0x8] sm:$0xff]
        %v326 = vld [vmem:[%s1 + $0x10] sm:$0xff]
        %v327 = vld [vmem:[%s1 + $0x18] sm:$0xff]
        %v328 = vld [vmem:[%s1 + $0x20] sm:$0xff]
        %v329 = vld [vmem:[%s1 + $0x28] sm:$0xff]
        %v330 = vld [vmem:[%s1 + $0x30] sm:$0xff]
        %v331 = vld [vmem:[%s1 + $0x38] sm:$0xff]
        %v332 = vld [vmem:[#allocation2] sm:$0xf]
        %v333 = vld [vmem:[%s307] sm:$0xf]
        %v334 = vld [vmem:[%s307 + $0x4] sm:$0xf]
        %v335 = vld [vmem:[%s307 + $0x8] sm:$0xf]
        %v336 = vld [vmem:[%s307 + $0xc] sm:$0xf]
        %v337 = vld [vmem:[%s312] sm:$0xff]
        %v338 = vld [vmem:[%s312 + $0x8] sm:$0xff]
        %v339 = vld [vmem:[%s312 + $0x10] sm:$0xff]
        %v340 = vld [vmem:[%s312 + $0x18] sm:$0xff]
        %342 = vset.pattern.permute.xlu0 0
        %343 = vperm.xlu0 %342, %v337
        %v344 = vpop.permute.xlu0 %343
        %347 = vset.pattern.permute.xlu0 0
        %348 = vperm.xlu0 %347, %v338
        %v349 = vpop.permute.xlu0 %348
        %352 = vset.pattern.permute.xlu0 0
        %353 = vperm.xlu0 %352, %v339
        %v354 = vpop.permute.xlu0 %353
        %357 = vset.pattern.permute.xlu0 0
        %358 = vperm.xlu0 %357, %v340
        %v359 = vpop.permute.xlu0 %358
        %v365 = vunpack.c.l.b16 %v333
        %v366 = vunpack.c.l.b16 %v334
        %v367 = vunpack.c.l.b16 %v335
        %v368 = vunpack.c.l.b16 %v336
        %v369 = vpack.c.b16 %v366, %v365
        %v370 = vpack.c.b16 %v368, %v367
        %v379 = vunpack.c.l.b16 %v324
        %v380 = vunpack.c.h.b16 %v324
        %v381 = vunpack.c.l.b16 %v325
        %v382 = vunpack.c.h.b16 %v325
        %v383 = vunpack.c.l.b16 %v326
        %v384 = vunpack.c.h.b16 %v326
        %v385 = vunpack.c.l.b16 %v327
        %v386 = vunpack.c.h.b16 %v327
        %v387 = vunpack.c.l.b16 %v328
        %v388 = vunpack.c.h.b16 %v328
        %v389 = vunpack.c.l.b16 %v329
        %v390 = vunpack.c.h.b16 %v329
        %v391 = vunpack.c.l.b16 %v330
        %v392 = vunpack.c.h.b16 %v330
        %v393 = vunpack.c.l.b16 %v331
        %v394 = vunpack.c.h.b16 %v331
        %v395 = vpack.c.b16 %v383, %v379
        %v396 = vpack.c.b16 %v384, %v380
        %v397 = vpack.c.b16 %v385, %v381
        %v398 = vpack.c.b16 %v386, %v382
        %v399 = vpack.c.b16 %v391, %v387
        %v400 = vpack.c.b16 %v392, %v388
        %v401 = vpack.c.b16 %v393, %v389
        %v402 = vpack.c.b16 %v394, %v390
        %vm411 = vcmask 261120
        %v413 = vsel %vm411, %v369, 0
        %v416 = vsel %vm411, %v370, 0
        %418 = vmatprep.subr.bf16.mxu0 %v396
        %419 = vmatpush1.bf16.msra.mxu0 %v395
        %420 = vmatprep.subr.bf16.mxu0 %v400
        %421 = vmatpush1.bf16.msra.mxu0 %v399
        %422 = vmatprep.subr.bf16.mxu0 0
        %423 = vmatpush1.bf16.msra.mxu0 0
        %424 = vmatprep.subr.bf16.mxu0 0
        %425 = vmatpush1.bf16.msra.mxu0 0
        %426 = vmatprep.subr.bf16.mxu0 0
        %427 = vmatpush1.bf16.msra.mxu0 0
        %428 = vmatprep.subr.bf16.mxu0 0
        %429 = vmatpush1.bf16.msra.mxu0 0
        %430 = vmatprep.subr.bf16.mxu0 0
        %431 = vmatpush1.bf16.msra.mxu0 0
        %432 = vmatprep.subr.bf16.mxu0 0
        %433 = vmatpush1.bf16.msra.mxu0 0
        %434 = vmatprep.subr.bf16.mxu0 0
        %435 = vmatpush1.bf16.msra.mxu0 0
        %436 = vmatprep.subr.bf16.mxu0 0
        %437 = vmatpush1.bf16.msra.mxu0 0
        %438 = vmatprep.subr.bf16.mxu0 0
        %439 = vmatpush1.bf16.msra.mxu0 0
        %440 = vmatprep.subr.bf16.mxu0 0
        %441 = vmatpush1.bf16.msra.mxu0 0
        %442 = vmatprep.subr.bf16.mxu0 0
        %443 = vmatpush1.bf16.msra.mxu0 0
        %444 = vmatprep.subr.bf16.mxu0 0
        %445 = vmatpush1.bf16.msra.mxu0 0
        %446 = vmatprep.subr.bf16.mxu0 0
        %447 = vmatpush1.bf16.msra.mxu0 0
        %448 = vmatprep.subr.bf16.mxu0 0
        %449 = vmatpush1.bf16.msra.mxu0 0
        %450 = vmatprep.mubr.bf16.mxu0 0
        %451 = vmatmul.mubr.bf16.gmra.mrb[0].mxu0 %v413
        %v452 = vpop.f32.mrb[0].mxu0
        %v453 = vadd.f32 %v344, %v452
        %v454 = vpop.f32.mrb[0].mxu0
        %v455 = vadd.f32 %v344, %v454
        %v456 = vpop.f32.mrb[0].mxu0
        %v457 = vadd.f32 %v349, %v456
        %v458 = vpop.f32.mrb[0].mxu0
        %v459 = vadd.f32 %v349, %v458
        %460 = vmatprep.mubr.bf16.mxu0 0
        %461 = vmatmul.mubr.bf16.gmra.mrb[0].mxu0 %v416
        %v462 = vpop.f32.mrb[0].mxu0
        %v463 = vadd.f32 %v354, %v462
        %v464 = vpop.f32.mrb[0].mxu0
        %v465 = vadd.f32 %v354, %v464
        %v466 = vpop.f32.mrb[0].mxu0
        %v467 = vadd.f32 %v359, %v466
        %v468 = vpop.f32.mrb[0].mxu0
        %v469 = vadd.f32 %v359, %v468
        %470 = vdwg.mxu0
        %471 = vmatprep.subr.bf16.mxu0 %v398
        %472 = vmatpush1.bf16.msra.mxu0 %v397
        %473 = vmatprep.subr.bf16.mxu0 %v402
        %474 = vmatpush1.bf16.msra.mxu0 %v401
        %475 = vmatprep.subr.bf16.mxu0 0
        %476 = vmatpush1.bf16.msra.mxu0 0
        %477 = vmatprep.subr.bf16.mxu0 0
        %478 = vmatpush1.bf16.msra.mxu0 0
        %479 = vmatprep.subr.bf16.mxu0 0
        %480 = vmatpush1.bf16.msra.mxu0 0
        %481 = vmatprep.subr.bf16.mxu0 0
        %482 = vmatpush1.bf16.msra.mxu0 0
        %483 = vmatprep.subr.bf16.mxu0 0
        %484 = vmatpush1.bf16.msra.mxu0 0
        %485 = vmatprep.subr.bf16.mxu0 0
        %486 = vmatpush1.bf16.msra.mxu0 0
        %487 = vmatprep.subr.bf16.mxu0 0
        %488 = vmatpush1.bf16.msra.mxu0 0
        %489 = vmatprep.subr.bf16.mxu0 0
        %490 = vmatpush1.bf16.msra.mxu0 0
        %491 = vmatprep.subr.bf16.mxu0 0
        %492 = vmatpush1.bf16.msra.mxu0 0
        %493 = vmatprep.subr.bf16.mxu0 0
        %494 = vmatpush1.bf16.msra.mxu0 0
        %495 = vmatprep.subr.bf16.mxu0 0
        %496 = vmatpush1.bf16.msra.mxu0 0
        %497 = vmatprep.subr.bf16.mxu0 0
        %498 = vmatpush1.bf16.msra.mxu0 0
        %499 = vmatprep.subr.bf16.mxu0 0
        %500 = vmatpush1.bf16.msra.mxu0 0
        %501 = vmatprep.subr.bf16.mxu0 0
        %502 = vmatpush1.bf16.msra.mxu0 0
        %503 = vmatprep.mubr.bf16.mxu0 0
        %504 = vmatmul.mubr.bf16.gmra.mrb[0].mxu0 %v413
        %v505 = vpop.f32.mrb[0].mxu0
        %v506 = vadd.f32 %v344, %v505
        %v507 = vpop.f32.mrb[0].mxu0
        %v508 = vadd.f32 %v344, %v507
        %v509 = vpop.f32.mrb[0].mxu0
        %v510 = vadd.f32 %v349, %v509
        %v511 = vpop.f32.mrb[0].mxu0
        %v512 = vadd.f32 %v349, %v511
        %513 = vmatprep.mubr.bf16.mxu0 0
        %514 = vmatmul.mubr.bf16.gmra.mrb[0].mxu0 %v416
        %v515 = vpop.f32.mrb[0].mxu0
        %v516 = vadd.f32 %v354, %v515
        %v517 = vpop.f32.mrb[0].mxu0
        %v518 = vadd.f32 %v354, %v517
        %v519 = vpop.f32.mrb[0].mxu0
        %v520 = vadd.f32 %v359, %v519
        %v521 = vpop.f32.mrb[0].mxu0
        %v522 = vadd.f32 %v359, %v521
        %523 = vdwg.mxu0
        %v524 = vmax.f32 %v453, 0.0
        %v525 = vmax.f32 %v455, 0.0
        %v526 = vmax.f32 %v506, 0.0
        %v527 = vmax.f32 %v508, 0.0
        %v528 = vmax.f32 %v457, 0.0
        %v529 = vmax.f32 %v459, 0.0
        %v530 = vmax.f32 %v510, 0.0
        %v531 = vmax.f32 %v512, 0.0
        %v532 = vmax.f32 %v463, 0.0
        %v533 = vmax.f32 %v465, 0.0
        %v534 = vmax.f32 %v516, 0.0
        %v535 = vmax.f32 %v518, 0.0
        %v536 = vmax.f32 %v467, 0.0
        %v537 = vmax.f32 %v469, 0.0
        %v538 = vmax.f32 %v520, 0.0
        %v539 = vmax.f32 %v522, 0.0
        %v540 = vld [vmem:[%s317] sm:$0xf]
        %v541 = vld [vmem:[%s317 + $0x4] sm:$0xf]
        %v542 = vld [vmem:[%s317 + $0x8] sm:$0xf]
        %v543 = vld [vmem:[%s317 + $0xc] sm:$0xf]
        %v544 = vpack.c.bf16 %v528, %v524
        %v545 = vpack.c.bf16 %v529, %v525
        %v546 = vpack.c.bf16 %v530, %v526
        %v547 = vpack.c.bf16 %v531, %v527
        %v548 = vpack.c.bf16 %v536, %v532
        %v549 = vpack.c.bf16 %v537, %v533
        %v550 = vpack.c.bf16 %v538, %v534
        %v551 = vpack.c.bf16 %v539, %v535
        %v556 = vunpack.c.l.b16 %v540
        %v557 = vunpack.c.l.b16 %v541
        %v558 = vunpack.c.l.b16 %v542
        %v559 = vunpack.c.l.b16 %v543
        %v560 = vpack.c.b16 %v557, %v556
        %v561 = vpack.c.b16 %v559, %v558
        %v563 = vsel %vm411, %v560, 0
        %v566 = vsel %vm411, %v561, 0
        %568 = vmatprep.subr.bf16.mxu0 %v545
        %569 = vmatpush1.bf16.msra.mxu0 %v544
        %570 = vmatprep.subr.bf16.mxu0 %v549
        %571 = vmatpush1.bf16.msra.mxu0 %v548
        %572 = vmatprep.subr.bf16.mxu0 0
        %573 = vmatpush1.bf16.msra.mxu0 0
        %574 = vmatprep.subr.bf16.mxu0 0
        %575 = vmatpush1.bf16.msra.mxu0 0
        %576 = vmatprep.subr.bf16.mxu0 0
        %577 = vmatpush1.bf16.msra.mxu0 0
        %578 = vmatprep.subr.bf16.mxu0 0
        %579 = vmatpush1.bf16.msra.mxu0 0
        %580 = vmatprep.subr.bf16.mxu0 0
        %581 = vmatpush1.bf16.msra.mxu0 0
        %582 = vmatprep.subr.bf16.mxu0 0
        %583 = vmatpush1.bf16.msra.mxu0 0
        %584 = vmatprep.subr.bf16.mxu0 0
        %585 = vmatpush1.bf16.msra.mxu0 0
        %586 = vmatprep.subr.bf16.mxu0 0
        %587 = vmatpush1.bf16.msra.mxu0 0
        %588 = vmatprep.subr.bf16.mxu0 0
        %589 = vmatpush1.bf16.msra.mxu0 0
        %590 = vmatprep.subr.bf16.mxu0 0
        %591 = vmatpush1.bf16.msra.mxu0 0
        %592 = vmatprep.subr.bf16.mxu0 0
        %593 = vmatpush1.bf16.msra.mxu0 0
        %594 = vmatprep.subr.bf16.mxu0 0
        %595 = vmatpush1.bf16.msra.mxu0 0
        %596 = vmatprep.subr.bf16.mxu0 0
        %597 = vmatpush1.bf16.msra.mxu0 0
        %598 = vmatprep.subr.bf16.mxu0 0
        %599 = vmatpush1.bf16.msra.mxu0 0
        %600 = vmatprep.mubr.bf16.mxu0 0
        %601 = vmatmul.mubr.bf16.gmra.mrb[0].mxu0 %v563
        %v602 = vpop.f32.mrb[0].mxu0
        %v603 = vadd.f32 0.0, %v602
        %v604 = vpop.f32.mrb[0].mxu0
        %v605 = vadd.f32 0.0, %v604
        %v606 = vpop.f32.mrb[0].mxu0
        %v607 = vadd.f32 0.0, %v606
        %v608 = vpop.f32.mrb[0].mxu0
        %v609 = vadd.f32 0.0, %v608
        %610 = vmatprep.mubr.bf16.mxu0 0
        %611 = vmatmul.mubr.bf16.gmra.mrb[0].mxu0 %v566
        %v612 = vpop.f32.mrb[0].mxu0
        %v613 = vadd.f32 0.0, %v612
        %v614 = vpop.f32.mrb[0].mxu0
        %v615 = vadd.f32 0.0, %v614
        %v616 = vpop.f32.mrb[0].mxu0
        %v617 = vadd.f32 0.0, %v616
        %v618 = vpop.f32.mrb[0].mxu0
        %v619 = vadd.f32 0.0, %v618
        %620 = vdwg.mxu0
        %621 = vmatprep.subr.bf16.mxu0 %v547
        %622 = vmatpush1.bf16.msra.mxu0 %v546
        %623 = vmatprep.subr.bf16.mxu0 %v551
        %624 = vmatpush1.bf16.msra.mxu0 %v550
        %625 = vmatprep.subr.bf16.mxu0 0
        %626 = vmatpush1.bf16.msra.mxu0 0
        %627 = vmatprep.subr.bf16.mxu0 0
        %628 = vmatpush1.bf16.msra.mxu0 0
        %629 = vmatprep.subr.bf16.mxu0 0
        %630 = vmatpush1.bf16.msra.mxu0 0
        %631 = vmatprep.subr.bf16.mxu0 0
        %632 = vmatpush1.bf16.msra.mxu0 0
        %633 = vmatprep.subr.bf16.mxu0 0
        %634 = vmatpush1.bf16.msra.mxu0 0
        %635 = vmatprep.subr.bf16.mxu0 0
        %636 = vmatpush1.bf16.msra.mxu0 0
        %637 = vmatprep.subr.bf16.mxu0 0
        %638 = vmatpush1.bf16.msra.mxu0 0
        %639 = vmatprep.subr.bf16.mxu0 0
        %640 = vmatpush1.bf16.msra.mxu0 0
        %641 = vmatprep.subr.bf16.mxu0 0
        %642 = vmatpush1.bf16.msra.mxu0 0
        %643 = vmatprep.subr.bf16.mxu0 0
        %644 = vmatpush1.bf16.msra.mxu0 0
        %645 = vmatprep.subr.bf16.mxu0 0
        %646 = vmatpush1.bf16.msra.mxu0 0
        %647 = vmatprep.subr.bf16.mxu0 0
        %648 = vmatpush1.bf16.msra.mxu0 0
        %649 = vmatprep.subr.bf16.mxu0 0
        %650 = vmatpush1.bf16.msra.mxu0 0
        %651 = vmatprep.subr.bf16.mxu0 0
        %652 = vmatpush1.bf16.msra.mxu0 0
        %653 = vmatprep.mubr.bf16.mxu0 0
        %654 = vmatmul.mubr.bf16.gmra.mrb[0].mxu0 %v563
        %v655 = vpop.f32.mrb[0].mxu0
        %v656 = vadd.f32 0.0, %v655
        %v657 = vpop.f32.mrb[0].mxu0
        %v658 = vadd.f32 0.0, %v657
        %v659 = vpop.f32.mrb[0].mxu0
        %v660 = vadd.f32 0.0, %v659
        %v661 = vpop.f32.mrb[0].mxu0
        %v662 = vadd.f32 0.0, %v661
        %663 = vmatprep.mubr.bf16.mxu0 0
        %664 = vmatmul.mubr.bf16.gmra.mrb[0].mxu0 %v566
        %v665 = vpop.f32.mrb[0].mxu0
        %v666 = vadd.f32 0.0, %v665
        %v667 = vpop.f32.mrb[0].mxu0
        %v668 = vadd.f32 0.0, %v667
        %v669 = vpop.f32.mrb[0].mxu0
        %v670 = vadd.f32 0.0, %v669
        %v671 = vpop.f32.mrb[0].mxu0
        %v672 = vadd.f32 0.0, %v671
        %673 = vdwg.mxu0
        %v674 = vld [vmem:[%s322] sm:$0xff]
        %v675 = vld [vmem:[%s322 + $0x8] sm:$0xff]
        %v676 = vld [vmem:[%s322 + $0x10] sm:$0xff]
        %v677 = vld [vmem:[%s322 + $0x18] sm:$0xff]
        %679 = vset.pattern.permute.xlu0 0
        %680 = vperm.xlu0 %679, %v674
        %v681 = vpop.permute.xlu0 %680
        %684 = vset.pattern.permute.xlu0 0
        %685 = vperm.xlu0 %684, %v675
        %v686 = vpop.permute.xlu0 %685
        %689 = vset.pattern.permute.xlu0 0
        %690 = vperm.xlu0 %689, %v676
        %v691 = vpop.permute.xlu0 %690
        %694 = vset.pattern.permute.xlu0 0
        %695 = vperm.xlu0 %694, %v677
        %v696 = vpop.permute.xlu0 %695
        %v698 = vmul.f32 %v603, %v681
        %v699 = vmul.f32 %v605, %v681
        %v700 = vmul.f32 %v656, %v681
        %v701 = vmul.f32 %v658, %v681
        %v702 = vmul.f32 %v607, %v686
        %v703 = vmul.f32 %v609, %v686
        %v704 = vmul.f32 %v660, %v686
        %v705 = vmul.f32 %v662, %v686
        %v706 = vmul.f32 %v613, %v691
        %v707 = vmul.f32 %v615, %v691
        %v708 = vmul.f32 %v666, %v691
        %v709 = vmul.f32 %v668, %v691
        %v710 = vmul.f32 %v617, %v696
        %v711 = vmul.f32 %v619, %v696
        %v712 = vmul.f32 %v670, %v696
        %v713 = vmul.f32 %v672, %v696
        %v714 = vadd.f32 %v603, %v698
        %v715 = vadd.f32 %v605, %v699
        %v716 = vadd.f32 %v656, %v700
        %v717 = vadd.f32 %v658, %v701
        %v718 = vadd.f32 %v607, %v702
        %v719 = vadd.f32 %v609, %v703
        %v720 = vadd.f32 %v660, %v704
        %v721 = vadd.f32 %v662, %v705
        %v722 = vadd.f32 %v613, %v706
        %v723 = vadd.f32 %v615, %v707
        %v724 = vadd.f32 %v666, %v708
        %v725 = vadd.f32 %v668, %v709
        %v726 = vadd.f32 %v617, %v710
        %v727 = vadd.f32 %v619, %v711
        %v728 = vadd.f32 %v670, %v712
        %v729 = vadd.f32 %v672, %v713
        %734 = vrot.lane.b32.xlu0 %v658, 1
        %v735 = vpop.permute.xlu0 %734
        %736 = vrot.lane.b32.xlu0 %v662, 1
        %v737 = vpop.permute.xlu0 %736
        %738 = vrot.lane.b32.xlu0 %v668, 1
        %v739 = vpop.permute.xlu0 %738
        %740 = vrot.lane.b32.xlu0 %v672, 1
        %v741 = vpop.permute.xlu0 %740
        %758 = vrot.lane.b32.xlu0 %v603, 1
        %v759 = vpop.permute.xlu0 %758
        %760 = vrot.lane.b32.xlu0 %v605, 1
        %v761 = vpop.permute.xlu0 %760
        %762 = vrot.lane.b32.xlu0 %v656, 1
        %v763 = vpop.permute.xlu0 %762
        %764 = vrot.lane.b32.xlu0 %v607, 1
        %v765 = vpop.permute.xlu0 %764
        %766 = vrot.lane.b32.xlu0 %v609, 1
        %v767 = vpop.permute.xlu0 %766
        %768 = vrot.lane.b32.xlu0 %v660, 1
        %v769 = vpop.permute.xlu0 %768
        %770 = vrot.lane.b32.xlu0 %v613, 1
        %v771 = vpop.permute.xlu0 %770
        %772 = vrot.lane.b32.xlu0 %v615, 1
        %v773 = vpop.permute.xlu0 %772
        %774 = vrot.lane.b32.xlu0 %v666, 1
        %v775 = vpop.permute.xlu0 %774
        %776 = vrot.lane.b32.xlu0 %v617, 1
        %v777 = vpop.permute.xlu0 %776
        %778 = vrot.lane.b32.xlu0 %v619, 1
        %v779 = vpop.permute.xlu0 %778
        %780 = vrot.lane.b32.xlu0 %v670, 1
        %v781 = vpop.permute.xlu0 %780
        %vm782 = vcmask 7168
        %v783 = vsel %vm782, %v759, %v761
        %v784 = vsel %vm782, %v761, %v763
        %v785 = vsel %vm782, %v763, %v735
        %v786 = vsel %vm782, %v765, %v767
        %v787 = vsel %vm782, %v767, %v769
        %v788 = vsel %vm782, %v769, %v737
        %v789 = vsel %vm782, %v771, %v773
        %v790 = vsel %vm782, %v773, %v775
        %v791 = vsel %vm782, %v775, %v739
        %v792 = vsel %vm782, %v777, %v779
        %v793 = vsel %vm782, %v779, %v781
        %v794 = vsel %vm782, %v781, %v741
        %v811 = vsel %vm782, %v735, %v759
        %v812 = vsel %vm782, %v737, %v765
        %v813 = vsel %vm782, %v739, %v771
        %v814 = vsel %vm782, %v741, %v777
        %vm815 = vcmp.ge.f32.partialorder %v332, 1.0
        %v816 = vsel %vm815, 1, 0
        %v817 = vcvt.s32.f32 %v816
        %818 = vset.pattern.permute.xlu0 1
        %819 = vperm.xlu0 %818, %v674
        %v820 = vpop.permute.xlu0 %819
        %822 = vset.pattern.permute.xlu0 1
        %823 = vperm.xlu0 %822, %v675
        %v824 = vpop.permute.xlu0 %823
        %826 = vset.pattern.permute.xlu0 1
        %827 = vperm.xlu0 %826, %v676
        %v828 = vpop.permute.xlu0 %827
        %830 = vset.pattern.permute.xlu0 1
        %831 = vperm.xlu0 %830, %v677
        %v832 = vpop.permute.xlu0 %831
        %v834 = vmul.f32 %v811, %v820
        %v835 = vmul.f32 %v783, %v820
        %v836 = vmul.f32 %v784, %v820
        %v837 = vmul.f32 %v785, %v820
        %v838 = vmul.f32 %v812, %v824
        %v839 = vmul.f32 %v786, %v824
        %v840 = vmul.f32 %v787, %v824
        %v841 = vmul.f32 %v788, %v824
        %v842 = vmul.f32 %v813, %v828
        %v843 = vmul.f32 %v789, %v828
        %v844 = vmul.f32 %v790, %v828
        %v845 = vmul.f32 %v791, %v828
        %v846 = vmul.f32 %v814, %v832
        %v847 = vmul.f32 %v792, %v832
        %v848 = vmul.f32 %v793, %v832
        %v849 = vmul.f32 %v794, %v832
        %v851 = vlaneseq
        %v852 = vshrl.u32 %v851, 7
        %v853 = vsub.s32 0, %v852
        %v854 = vrot.slane %v817, %v853
        %v855 = vlaneseq
        %v856 = vshrl.u32 %v855, 7
        %v857 = vsub.s32 1, %v856
        %v858 = vrot.slane %v817, %v857
        %v859 = vlaneseq
        %v860 = vshrl.u32 %v859, 7
        %v861 = vsub.s32 2, %v860
        %v862 = vrot.slane %v817, %v861
        %v863 = vlaneseq
        %v864 = vshrl.u32 %v863, 7
        %v865 = vsub.s32 3, %v864
        %v866 = vrot.slane %v817, %v865
        %v871 = vmul.f32 %v834, %v854
        %v872 = vmul.f32 %v835, %v858
        %v873 = vmul.f32 %v836, %v862
        %v874 = vmul.f32 %v837, %v866
        %v875 = vmul.f32 %v838, %v854
        %v876 = vmul.f32 %v839, %v858
        %v877 = vmul.f32 %v840, %v862
        %v878 = vmul.f32 %v841, %v866
        %v879 = vmul.f32 %v842, %v854
        %v880 = vmul.f32 %v843, %v858
        %v881 = vmul.f32 %v844, %v862
        %v882 = vmul.f32 %v845, %v866
        %v883 = vmul.f32 %v846, %v854
        %v884 = vmul.f32 %v847, %v858
        %v885 = vmul.f32 %v848, %v862
        %v886 = vmul.f32 %v849, %v866
        %v887 = vadd.f32 %v714, %v871
        %v888 = vadd.f32 %v715, %v872
        %v889 = vadd.f32 %v716, %v873
        %v890 = vadd.f32 %v717, %v874
        %v891 = vadd.f32 %v718, %v875
        %v892 = vadd.f32 %v719, %v876
        %v893 = vadd.f32 %v720, %v877
        %v894 = vadd.f32 %v721, %v878
        %v895 = vadd.f32 %v722, %v879
        %v896 = vadd.f32 %v723, %v880
        %v897 = vadd.f32 %v724, %v881
        %v898 = vadd.f32 %v725, %v882
        %v899 = vadd.f32 %v726, %v883
        %v900 = vadd.f32 %v727, %v884
        %v901 = vadd.f32 %v728, %v885
        %v902 = vadd.f32 %v729, %v886
        %903 = vrot.lane.b32.xlu0 %v658, 2
        %v904 = vpop.permute.xlu0 %903
        %905 = vrot.lane.b32.xlu0 %v662, 2
        %v906 = vpop.permute.xlu0 %905
        %907 = vrot.lane.b32.xlu0 %v668, 2
        %v908 = vpop.permute.xlu0 %907
        %909 = vrot.lane.b32.xlu0 %v672, 2
        %v910 = vpop.permute.xlu0 %909
        %915 = vrot.lane.b32.xlu0 %v603, 2
        %v916 = vpop.permute.xlu0 %915
        %917 = vrot.lane.b32.xlu0 %v605, 2
        %v918 = vpop.permute.xlu0 %917
        %919 = vrot.lane.b32.xlu0 %v656, 2
        %v920 = vpop.permute.xlu0 %919
        %921 = vrot.lane.b32.xlu0 %v607, 2
        %v922 = vpop.permute.xlu0 %921
        %923 = vrot.lane.b32.xlu0 %v609, 2
        %v924 = vpop.permute.xlu0 %923
        %925 = vrot.lane.b32.xlu0 %v660, 2
        %v926 = vpop.permute.xlu0 %925
        %927 = vrot.lane.b32.xlu0 %v613, 2
        %v928 = vpop.permute.xlu0 %927
        %929 = vrot.lane.b32.xlu0 %v615, 2
        %v930 = vpop.permute.xlu0 %929
        %931 = vrot.lane.b32.xlu0 %v666, 2
        %v932 = vpop.permute.xlu0 %931
        %933 = vrot.lane.b32.xlu0 %v617, 2
        %v934 = vpop.permute.xlu0 %933
        %935 = vrot.lane.b32.xlu0 %v619, 2
        %v936 = vpop.permute.xlu0 %935
        %937 = vrot.lane.b32.xlu0 %v670, 2
        %v938 = vpop.permute.xlu0 %937
        %vm939 = vcmask 15360
        %v940 = vsel %vm939, %v916, %v918
        %v941 = vsel %vm939, %v918, %v920
        %v942 = vsel %vm939, %v920, %v904
        %v943 = vsel %vm939, %v922, %v924
        %v944 = vsel %vm939, %v924, %v926
        %v945 = vsel %vm939, %v926, %v906
        %v946 = vsel %vm939, %v928, %v930
        %v947 = vsel %vm939, %v930, %v932
        %v948 = vsel %vm939, %v932, %v908
        %v949 = vsel %vm939, %v934, %v936
        %v950 = vsel %vm939, %v936, %v938
        %v951 = vsel %vm939, %v938, %v910
        %v968 = vsel %vm939, %v904, %v916
        %v969 = vsel %vm939, %v906, %v922
        %v970 = vsel %vm939, %v908, %v928
        %v971 = vsel %vm939, %v910, %v934
        %vm972 = vcmp.ge.f32.partialorder %v332, 2.0
        %v973 = vsel %vm972, 1, 0
        %v974 = vcvt.s32.f32 %v973
        %975 = vset.pattern.permute.xlu0 2
        %976 = vperm.xlu0 %975, %v674
        %v977 = vpop.permute.xlu0 %976
        %979 = vset.pattern.permute.xlu0 2
        %980 = vperm.xlu0 %979, %v675
        %v981 = vpop.permute.xlu0 %980
        %983 = vset.pattern.permute.xlu0 2
        %984 = vperm.xlu0 %983, %v676
        %v985 = vpop.permute.xlu0 %984
        %987 = vset.pattern.permute.xlu0 2
        %988 = vperm.xlu0 %987, %v677
        %v989 = vpop.permute.xlu0 %988
        %v991 = vmul.f32 %v968, %v977
        %v992 = vmul.f32 %v940, %v977
        %v993 = vmul.f32 %v941, %v977
        %v994 = vmul.f32 %v942, %v977
        %v995 = vmul.f32 %v969, %v981
        %v996 = vmul.f32 %v943, %v981
        %v997 = vmul.f32 %v944, %v981
        %v998 = vmul.f32 %v945, %v981
        %v999 = vmul.f32 %v970, %v985
        %v1000 = vmul.f32 %v946, %v985
        %v1001 = vmul.f32 %v947, %v985
        %v1002 = vmul.f32 %v948, %v985
        %v1003 = vmul.f32 %v971, %v989
        %v1004 = vmul.f32 %v949, %v989
        %v1005 = vmul.f32 %v950, %v989
        %v1006 = vmul.f32 %v951, %v989
        %v1008 = vlaneseq
        %v1009 = vshrl.u32 %v1008, 7
        %v1010 = vsub.s32 0, %v1009
        %v1011 = vrot.slane %v974, %v1010
        %v1012 = vlaneseq
        %v1013 = vshrl.u32 %v1012, 7
        %v1014 = vsub.s32 1, %v1013
        %v1015 = vrot.slane %v974, %v1014
        %v1016 = vlaneseq
        %v1017 = vshrl.u32 %v1016, 7
        %v1018 = vsub.s32 2, %v1017
        %v1019 = vrot.slane %v974, %v1018
        %v1020 = vlaneseq
        %v1021 = vshrl.u32 %v1020, 7
        %v1022 = vsub.s32 3, %v1021
        %v1023 = vrot.slane %v974, %v1022
        %v1028 = vmul.f32 %v991, %v1011
        %v1029 = vmul.f32 %v992, %v1015
        %v1030 = vmul.f32 %v993, %v1019
        %v1031 = vmul.f32 %v994, %v1023
        %v1032 = vmul.f32 %v995, %v1011
        %v1033 = vmul.f32 %v996, %v1015
        %v1034 = vmul.f32 %v997, %v1019
        %v1035 = vmul.f32 %v998, %v1023
        %v1036 = vmul.f32 %v999, %v1011
        %v1037 = vmul.f32 %v1000, %v1015
        %v1038 = vmul.f32 %v1001, %v1019
        %v1039 = vmul.f32 %v1002, %v1023
        %v1040 = vmul.f32 %v1003, %v1011
        %v1041 = vmul.f32 %v1004, %v1015
        %v1042 = vmul.f32 %v1005, %v1019
        %v1043 = vmul.f32 %v1006, %v1023
        %v1044 = vadd.f32 %v887, %v1028
        %v1045 = vadd.f32 %v888, %v1029
        %v1046 = vadd.f32 %v889, %v1030
        %v1047 = vadd.f32 %v890, %v1031
        %v1048 = vadd.f32 %v891, %v1032
        %v1049 = vadd.f32 %v892, %v1033
        %v1050 = vadd.f32 %v893, %v1034
        %v1051 = vadd.f32 %v894, %v1035
        %v1052 = vadd.f32 %v895, %v1036
        %v1053 = vadd.f32 %v896, %v1037
        %v1054 = vadd.f32 %v897, %v1038
        %v1055 = vadd.f32 %v898, %v1039
        %v1056 = vadd.f32 %v899, %v1040
        %v1057 = vadd.f32 %v900, %v1041
        %v1058 = vadd.f32 %v901, %v1042
        %v1059 = vadd.f32 %v902, %v1043
        %1060 = vrot.lane.b32.xlu0 %v658, 3
        %v1061 = vpop.permute.xlu0 %1060
        %1062 = vrot.lane.b32.xlu0 %v662, 3
        %v1063 = vpop.permute.xlu0 %1062
        %1064 = vrot.lane.b32.xlu0 %v668, 3
        %v1065 = vpop.permute.xlu0 %1064
        %1066 = vrot.lane.b32.xlu0 %v672, 3
        %v1067 = vpop.permute.xlu0 %1066
        %1072 = vrot.lane.b32.xlu0 %v603, 3
        %v1073 = vpop.permute.xlu0 %1072
        %1074 = vrot.lane.b32.xlu0 %v605, 3
        %v1075 = vpop.permute.xlu0 %1074
        %1076 = vrot.lane.b32.xlu0 %v656, 3
        %v1077 = vpop.permute.xlu0 %1076
        %1078 = vrot.lane.b32.xlu0 %v607, 3
        %v1079 = vpop.permute.xlu0 %1078
        %1080 = vrot.lane.b32.xlu0 %v609, 3
        %v1081 = vpop.permute.xlu0 %1080
        %1082 = vrot.lane.b32.xlu0 %v660, 3
        %v1083 = vpop.permute.xlu0 %1082
        %1084 = vrot.lane.b32.xlu0 %v613, 3
        %v1085 = vpop.permute.xlu0 %1084
        %1086 = vrot.lane.b32.xlu0 %v615, 3
        %v1087 = vpop.permute.xlu0 %1086
        %1088 = vrot.lane.b32.xlu0 %v666, 3
        %v1089 = vpop.permute.xlu0 %1088
        %1090 = vrot.lane.b32.xlu0 %v617, 3
        %v1091 = vpop.permute.xlu0 %1090
        %1092 = vrot.lane.b32.xlu0 %v619, 3
        %v1093 = vpop.permute.xlu0 %1092
        %1094 = vrot.lane.b32.xlu0 %v670, 3
        %v1095 = vpop.permute.xlu0 %1094
        %vm1096 = vcmask 23552
        %v1097 = vsel %vm1096, %v1073, %v1075
        %v1098 = vsel %vm1096, %v1075, %v1077
        %v1099 = vsel %vm1096, %v1077, %v1061
        %v1100 = vsel %vm1096, %v1079, %v1081
        %v1101 = vsel %vm1096, %v1081, %v1083
        %v1102 = vsel %vm1096, %v1083, %v1063
        %v1103 = vsel %vm1096, %v1085, %v1087
        %v1104 = vsel %vm1096, %v1087, %v1089
        %v1105 = vsel %vm1096, %v1089, %v1065
        %v1106 = vsel %vm1096, %v1091, %v1093
        %v1107 = vsel %vm1096, %v1093, %v1095
        %v1108 = vsel %vm1096, %v1095, %v1067
        %v1125 = vsel %vm1096, %v1061, %v1073
        %v1126 = vsel %vm1096, %v1063, %v1079
        %v1127 = vsel %vm1096, %v1065, %v1085
        %v1128 = vsel %vm1096, %v1067, %v1091
        %vm1129 = vcmp.ge.f32.partialorder %v332, 3.0
        %v1130 = vsel %vm1129, 1, 0
        %v1131 = vcvt.s32.f32 %v1130
        %1132 = vset.pattern.permute.xlu0 3
        %1133 = vperm.xlu0 %1132, %v674
        %v1134 = vpop.permute.xlu0 %1133
        %1136 = vset.pattern.permute.xlu0 3
        %1137 = vperm.xlu0 %1136, %v675
        %v1138 = vpop.permute.xlu0 %1137
        %1140 = vset.pattern.permute.xlu0 3
        %1141 = vperm.xlu0 %1140, %v676
        %v1142 = vpop.permute.xlu0 %1141
        %1144 = vset.pattern.permute.xlu0 3
        %1145 = vperm.xlu0 %1144, %v677
        %v1146 = vpop.permute.xlu0 %1145
        %v1148 = vmul.f32 %v1125, %v1134
        %v1149 = vmul.f32 %v1097, %v1134
        %v1150 = vmul.f32 %v1098, %v1134
        %v1151 = vmul.f32 %v1099, %v1134
        %v1152 = vmul.f32 %v1126, %v1138
        %v1153 = vmul.f32 %v1100, %v1138
        %v1154 = vmul.f32 %v1101, %v1138
        %v1155 = vmul.f32 %v1102, %v1138
        %v1156 = vmul.f32 %v1127, %v1142
        %v1157 = vmul.f32 %v1103, %v1142
        %v1158 = vmul.f32 %v1104, %v1142
        %v1159 = vmul.f32 %v1105, %v1142
        %v1160 = vmul.f32 %v1128, %v1146
        %v1161 = vmul.f32 %v1106, %v1146
        %v1162 = vmul.f32 %v1107, %v1146
        %v1163 = vmul.f32 %v1108, %v1146
        %v1165 = vlaneseq
        %v1166 = vshrl.u32 %v1165, 7
        %v1167 = vsub.s32 0, %v1166
        %v1168 = vrot.slane %v1131, %v1167
        %v1169 = vlaneseq
        %v1170 = vshrl.u32 %v1169, 7
        %v1171 = vsub.s32 1, %v1170
        %v1172 = vrot.slane %v1131, %v1171
        %v1173 = vlaneseq
        %v1174 = vshrl.u32 %v1173, 7
        %v1175 = vsub.s32 2, %v1174
        %v1176 = vrot.slane %v1131, %v1175
        %v1177 = vlaneseq
        %v1178 = vshrl.u32 %v1177, 7
        %v1179 = vsub.s32 3, %v1178
        %v1180 = vrot.slane %v1131, %v1179
        %v1185 = vmul.f32 %v1148, %v1168
        %v1186 = vmul.f32 %v1149, %v1172
        %v1187 = vmul.f32 %v1150, %v1176
        %v1188 = vmul.f32 %v1151, %v1180
        %v1189 = vmul.f32 %v1152, %v1168
        %v1190 = vmul.f32 %v1153, %v1172
        %v1191 = vmul.f32 %v1154, %v1176
        %v1192 = vmul.f32 %v1155, %v1180
        %v1193 = vmul.f32 %v1156, %v1168
        %v1194 = vmul.f32 %v1157, %v1172
        %v1195 = vmul.f32 %v1158, %v1176
        %v1196 = vmul.f32 %v1159, %v1180
        %v1197 = vmul.f32 %v1160, %v1168
        %v1198 = vmul.f32 %v1161, %v1172
        %v1199 = vmul.f32 %v1162, %v1176
        %v1200 = vmul.f32 %v1163, %v1180
        %v1201 = vadd.f32 %v1044, %v1185
        %v1202 = vadd.f32 %v1045, %v1186
        %v1203 = vadd.f32 %v1046, %v1187
        %v1204 = vadd.f32 %v1047, %v1188
        %v1205 = vadd.f32 %v1048, %v1189
        %v1206 = vadd.f32 %v1049, %v1190
        %v1207 = vadd.f32 %v1050, %v1191
        %v1208 = vadd.f32 %v1051, %v1192
        %v1209 = vadd.f32 %v1052, %v1193
        %v1210 = vadd.f32 %v1053, %v1194
        %v1211 = vadd.f32 %v1054, %v1195
        %v1212 = vadd.f32 %v1055, %v1196
        %v1213 = vadd.f32 %v1056, %v1197
        %v1214 = vadd.f32 %v1057, %v1198
        %v1215 = vadd.f32 %v1058, %v1199
        %v1216 = vadd.f32 %v1059, %v1200
        %1217 = vrot.lane.b32.xlu0 %v658, 4
        %v1218 = vpop.permute.xlu0 %1217
        %1219 = vrot.lane.b32.xlu0 %v662, 4
        %v1220 = vpop.permute.xlu0 %1219
        %1221 = vrot.lane.b32.xlu0 %v668, 4
        %v1222 = vpop.permute.xlu0 %1221
        %1223 = vrot.lane.b32.xlu0 %v672, 4
        %v1224 = vpop.permute.xlu0 %1223
        %1229 = vrot.lane.b32.xlu0 %v603, 4
        %v1230 = vpop.permute.xlu0 %1229
        %1231 = vrot.lane.b32.xlu0 %v605, 4
        %v1232 = vpop.permute.xlu0 %1231
        %1233 = vrot.lane.b32.xlu0 %v656, 4
        %v1234 = vpop.permute.xlu0 %1233
        %1235 = vrot.lane.b32.xlu0 %v607, 4
        %v1236 = vpop.permute.xlu0 %1235
        %1237 = vrot.lane.b32.xlu0 %v609, 4
        %v1238 = vpop.permute.xlu0 %1237
        %1239 = vrot.lane.b32.xlu0 %v660, 4
        %v1240 = vpop.permute.xlu0 %1239
        %1241 = vrot.lane.b32.xlu0 %v613, 4
        %v1242 = vpop.permute.xlu0 %1241
        %1243 = vrot.lane.b32.xlu0 %v615, 4
        %v1244 = vpop.permute.xlu0 %1243
        %1245 = vrot.lane.b32.xlu0 %v666, 4
        %v1246 = vpop.permute.xlu0 %1245
        %1247 = vrot.lane.b32.xlu0 %v617, 4
        %v1248 = vpop.permute.xlu0 %1247
        %1249 = vrot.lane.b32.xlu0 %v619, 4
        %v1250 = vpop.permute.xlu0 %1249
        %1251 = vrot.lane.b32.xlu0 %v670, 4
        %v1252 = vpop.permute.xlu0 %1251
        %vm1253 = vcmask 31744
        %v1254 = vsel %vm1253, %v1230, %v1232
        %v1255 = vsel %vm1253, %v1232, %v1234
        %v1256 = vsel %vm1253, %v1234, %v1218
        %v1257 = vsel %vm1253, %v1236, %v1238
        %v1258 = vsel %vm1253, %v1238, %v1240
        %v1259 = vsel %vm1253, %v1240, %v1220
        %v1260 = vsel %vm1253, %v1242, %v1244
        %v1261 = vsel %vm1253, %v1244, %v1246
        %v1262 = vsel %vm1253, %v1246, %v1222
        %v1263 = vsel %vm1253, %v1248, %v1250
        %v1264 = vsel %vm1253, %v1250, %v1252
        %v1265 = vsel %vm1253, %v1252, %v1224
        %v1282 = vsel %vm1253, %v1218, %v1230
        %v1283 = vsel %vm1253, %v1220, %v1236
        %v1284 = vsel %vm1253, %v1222, %v1242
        %v1285 = vsel %vm1253, %v1224, %v1248
        %vm1286 = vcmp.ge.f32.partialorder %v332, 4.0
        %v1287 = vsel %vm1286, 1, 0
        %v1288 = vcvt.s32.f32 %v1287
        %1289 = vset.pattern.permute.xlu0 4
        %1290 = vperm.xlu0 %1289, %v674
        %v1291 = vpop.permute.xlu0 %1290
        %1293 = vset.pattern.permute.xlu0 4
        %1294 = vperm.xlu0 %1293, %v675
        %v1295 = vpop.permute.xlu0 %1294
        %1297 = vset.pattern.permute.xlu0 4
        %1298 = vperm.xlu0 %1297, %v676
        %v1299 = vpop.permute.xlu0 %1298
        %1301 = vset.pattern.permute.xlu0 4
        %1302 = vperm.xlu0 %1301, %v677
        %v1303 = vpop.permute.xlu0 %1302
        %v1305 = vmul.f32 %v1282, %v1291
        %v1306 = vmul.f32 %v1254, %v1291
        %v1307 = vmul.f32 %v1255, %v1291
        %v1308 = vmul.f32 %v1256, %v1291
        %v1309 = vmul.f32 %v1283, %v1295
        %v1310 = vmul.f32 %v1257, %v1295
        %v1311 = vmul.f32 %v1258, %v1295
        %v1312 = vmul.f32 %v1259, %v1295
        %v1313 = vmul.f32 %v1284, %v1299
        %v1314 = vmul.f32 %v1260, %v1299
        %v1315 = vmul.f32 %v1261, %v1299
        %v1316 = vmul.f32 %v1262, %v1299
        %v1317 = vmul.f32 %v1285, %v1303
        %v1318 = vmul.f32 %v1263, %v1303
        %v1319 = vmul.f32 %v1264, %v1303
        %v1320 = vmul.f32 %v1265, %v1303
        %v1322 = vlaneseq
        %v1323 = vshrl.u32 %v1322, 7
        %v1324 = vsub.s32 0, %v1323
        %v1325 = vrot.slane %v1288, %v1324
        %v1326 = vlaneseq
        %v1327 = vshrl.u32 %v1326, 7
        %v1328 = vsub.s32 1, %v1327
        %v1329 = vrot.slane %v1288, %v1328
        %v1330 = vlaneseq
        %v1331 = vshrl.u32 %v1330, 7
        %v1332 = vsub.s32 2, %v1331
        %v1333 = vrot.slane %v1288, %v1332
        %v1334 = vlaneseq
        %v1335 = vshrl.u32 %v1334, 7
        %v1336 = vsub.s32 3, %v1335
        %v1337 = vrot.slane %v1288, %v1336
        %v1342 = vmul.f32 %v1305, %v1325
        %v1343 = vmul.f32 %v1306, %v1329
        %v1344 = vmul.f32 %v1307, %v1333
        %v1345 = vmul.f32 %v1308, %v1337
        %v1346 = vmul.f32 %v1309, %v1325
        %v1347 = vmul.f32 %v1310, %v1329
        %v1348 = vmul.f32 %v1311, %v1333
        %v1349 = vmul.f32 %v1312, %v1337
        %v1350 = vmul.f32 %v1313, %v1325
        %v1351 = vmul.f32 %v1314, %v1329
        %v1352 = vmul.f32 %v1315, %v1333
        %v1353 = vmul.f32 %v1316, %v1337
        %v1354 = vmul.f32 %v1317, %v1325
        %v1355 = vmul.f32 %v1318, %v1329
        %v1356 = vmul.f32 %v1319, %v1333
        %v1357 = vmul.f32 %v1320, %v1337
        %v1358 = vadd.f32 %v1201, %v1342
        %v1359 = vadd.f32 %v1202, %v1343
        %v1360 = vadd.f32 %v1203, %v1344
        %v1361 = vadd.f32 %v1204, %v1345
        %v1362 = vadd.f32 %v1205, %v1346
        %v1363 = vadd.f32 %v1206, %v1347
        %v1364 = vadd.f32 %v1207, %v1348
        %v1365 = vadd.f32 %v1208, %v1349
        %v1366 = vadd.f32 %v1209, %v1350
        %v1367 = vadd.f32 %v1210, %v1351
        %v1368 = vadd.f32 %v1211, %v1352
        %v1369 = vadd.f32 %v1212, %v1353
        %v1370 = vadd.f32 %v1213, %v1354
        %v1371 = vadd.f32 %v1214, %v1355
        %v1372 = vadd.f32 %v1215, %v1356
        %v1373 = vadd.f32 %v1216, %v1357
        %1374 = vrot.lane.b32.xlu0 %v658, 5
        %v1375 = vpop.permute.xlu0 %1374
        %1376 = vrot.lane.b32.xlu0 %v662, 5
        %v1377 = vpop.permute.xlu0 %1376
        %1378 = vrot.lane.b32.xlu0 %v668, 5
        %v1379 = vpop.permute.xlu0 %1378
        %1380 = vrot.lane.b32.xlu0 %v672, 5
        %v1381 = vpop.permute.xlu0 %1380
        %1386 = vrot.lane.b32.xlu0 %v603, 5
        %v1387 = vpop.permute.xlu0 %1386
        %1388 = vrot.lane.b32.xlu0 %v605, 5
        %v1389 = vpop.permute.xlu0 %1388
        %1390 = vrot.lane.b32.xlu0 %v656, 5
        %v1391 = vpop.permute.xlu0 %1390
        %1392 = vrot.lane.b32.xlu0 %v607, 5
        %v1393 = vpop.permute.xlu0 %1392
        %1394 = vrot.lane.b32.xlu0 %v609, 5
        %v1395 = vpop.permute.xlu0 %1394
        %1396 = vrot.lane.b32.xlu0 %v660, 5
        %v1397 = vpop.permute.xlu0 %1396
        %1398 = vrot.lane.b32.xlu0 %v613, 5
        %v1399 = vpop.permute.xlu0 %1398
        %1400 = vrot.lane.b32.xlu0 %v615, 5
        %v1401 = vpop.permute.xlu0 %1400
        %1402 = vrot.lane.b32.xlu0 %v666, 5
        %v1403 = vpop.permute.xlu0 %1402
        %1404 = vrot.lane.b32.xlu0 %v617, 5
        %v1405 = vpop.permute.xlu0 %1404
        %1406 = vrot.lane.b32.xlu0 %v619, 5
        %v1407 = vpop.permute.xlu0 %1406
        %1408 = vrot.lane.b32.xlu0 %v670, 5
        %v1409 = vpop.permute.xlu0 %1408
        %vm1410 = vcmask 39936
        %v1411 = vsel %vm1410, %v1387, %v1389
        %v1412 = vsel %vm1410, %v1389, %v1391
        %v1413 = vsel %vm1410, %v1391, %v1375
        %v1414 = vsel %vm1410, %v1393, %v1395
        %v1415 = vsel %vm1410, %v1395, %v1397
        %v1416 = vsel %vm1410, %v1397, %v1377
        %v1417 = vsel %vm1410, %v1399, %v1401
        %v1418 = vsel %vm1410, %v1401, %v1403
        %v1419 = vsel %vm1410, %v1403, %v1379
        %v1420 = vsel %vm1410, %v1405, %v1407
        %v1421 = vsel %vm1410, %v1407, %v1409
        %v1422 = vsel %vm1410, %v1409, %v1381
        %v1439 = vsel %vm1410, %v1375, %v1387
        %v1440 = vsel %vm1410, %v1377, %v1393
        %v1441 = vsel %vm1410, %v1379, %v1399
        %v1442 = vsel %vm1410, %v1381, %v1405
        %vm1443 = vcmp.ge.f32.partialorder %v332, 5.0
        %v1444 = vsel %vm1443, 1, 0
        %v1445 = vcvt.s32.f32 %v1444
        %1446 = vset.pattern.permute.xlu0 5
        %1447 = vperm.xlu0 %1446, %v674
        %v1448 = vpop.permute.xlu0 %1447
        %1450 = vset.pattern.permute.xlu0 5
        %1451 = vperm.xlu0 %1450, %v675
        %v1452 = vpop.permute.xlu0 %1451
        %1454 = vset.pattern.permute.xlu0 5
        %1455 = vperm.xlu0 %1454, %v676
        %v1456 = vpop.permute.xlu0 %1455
        %1458 = vset.pattern.permute.xlu0 5
        %1459 = vperm.xlu0 %1458, %v677
        %v1460 = vpop.permute.xlu0 %1459
        %v1462 = vmul.f32 %v1439, %v1448
        %v1463 = vmul.f32 %v1411, %v1448
        %v1464 = vmul.f32 %v1412, %v1448
        %v1465 = vmul.f32 %v1413, %v1448
        %v1466 = vmul.f32 %v1440, %v1452
        %v1467 = vmul.f32 %v1414, %v1452
        %v1468 = vmul.f32 %v1415, %v1452
        %v1469 = vmul.f32 %v1416, %v1452
        %v1470 = vmul.f32 %v1441, %v1456
        %v1471 = vmul.f32 %v1417, %v1456
        %v1472 = vmul.f32 %v1418, %v1456
        %v1473 = vmul.f32 %v1419, %v1456
        %v1474 = vmul.f32 %v1442, %v1460
        %v1475 = vmul.f32 %v1420, %v1460
        %v1476 = vmul.f32 %v1421, %v1460
        %v1477 = vmul.f32 %v1422, %v1460
        %v1479 = vlaneseq
        %v1480 = vshrl.u32 %v1479, 7
        %v1481 = vsub.s32 0, %v1480
        %v1482 = vrot.slane %v1445, %v1481
        %v1483 = vlaneseq
        %v1484 = vshrl.u32 %v1483, 7
        %v1485 = vsub.s32 1, %v1484
        %v1486 = vrot.slane %v1445, %v1485
        %v1487 = vlaneseq
        %v1488 = vshrl.u32 %v1487, 7
        %v1489 = vsub.s32 2, %v1488
        %v1490 = vrot.slane %v1445, %v1489
        %v1491 = vlaneseq
        %v1492 = vshrl.u32 %v1491, 7
        %v1493 = vsub.s32 3, %v1492
        %v1494 = vrot.slane %v1445, %v1493
        %v1499 = vmul.f32 %v1462, %v1482
        %v1500 = vmul.f32 %v1463, %v1486
        %v1501 = vmul.f32 %v1464, %v1490
        %v1502 = vmul.f32 %v1465, %v1494
        %v1503 = vmul.f32 %v1466, %v1482
        %v1504 = vmul.f32 %v1467, %v1486
        %v1505 = vmul.f32 %v1468, %v1490
        %v1506 = vmul.f32 %v1469, %v1494
        %v1507 = vmul.f32 %v1470, %v1482
        %v1508 = vmul.f32 %v1471, %v1486
        %v1509 = vmul.f32 %v1472, %v1490
        %v1510 = vmul.f32 %v1473, %v1494
        %v1511 = vmul.f32 %v1474, %v1482
        %v1512 = vmul.f32 %v1475, %v1486
        %v1513 = vmul.f32 %v1476, %v1490
        %v1514 = vmul.f32 %v1477, %v1494
        %v1515 = vadd.f32 %v1358, %v1499
        %v1516 = vadd.f32 %v1359, %v1500
        %v1517 = vadd.f32 %v1360, %v1501
        %v1518 = vadd.f32 %v1361, %v1502
        %v1519 = vadd.f32 %v1362, %v1503
        %v1520 = vadd.f32 %v1363, %v1504
        %v1521 = vadd.f32 %v1364, %v1505
        %v1522 = vadd.f32 %v1365, %v1506
        %v1523 = vadd.f32 %v1366, %v1507
        %v1524 = vadd.f32 %v1367, %v1508
        %v1525 = vadd.f32 %v1368, %v1509
        %v1526 = vadd.f32 %v1369, %v1510
        %v1527 = vadd.f32 %v1370, %v1511
        %v1528 = vadd.f32 %v1371, %v1512
        %v1529 = vadd.f32 %v1372, %v1513
        %v1530 = vadd.f32 %v1373, %v1514
        %1531 = vrot.lane.b32.xlu0 %v658, 6
        %v1532 = vpop.permute.xlu0 %1531
        %1533 = vrot.lane.b32.xlu0 %v662, 6
        %v1534 = vpop.permute.xlu0 %1533
        %1535 = vrot.lane.b32.xlu0 %v668, 6
        %v1536 = vpop.permute.xlu0 %1535
        %1537 = vrot.lane.b32.xlu0 %v672, 6
        %v1538 = vpop.permute.xlu0 %1537
        %1543 = vrot.lane.b32.xlu0 %v603, 6
        %v1544 = vpop.permute.xlu0 %1543
        %1545 = vrot.lane.b32.xlu0 %v605, 6
        %v1546 = vpop.permute.xlu0 %1545
        %1547 = vrot.lane.b32.xlu0 %v656, 6
        %v1548 = vpop.permute.xlu0 %1547
        %1549 = vrot.lane.b32.xlu0 %v607, 6
        %v1550 = vpop.permute.xlu0 %1549
        %1551 = vrot.lane.b32.xlu0 %v609, 6
        %v1552 = vpop.permute.xlu0 %1551
        %1553 = vrot.lane.b32.xlu0 %v660, 6
        %v1554 = vpop.permute.xlu0 %1553
        %1555 = vrot.lane.b32.xlu0 %v613, 6
        %v1556 = vpop.permute.xlu0 %1555
        %1557 = vrot.lane.b32.xlu0 %v615, 6
        %v1558 = vpop.permute.xlu0 %1557
        %1559 = vrot.lane.b32.xlu0 %v666, 6
        %v1560 = vpop.permute.xlu0 %1559
        %1561 = vrot.lane.b32.xlu0 %v617, 6
        %v1562 = vpop.permute.xlu0 %1561
        %1563 = vrot.lane.b32.xlu0 %v619, 6
        %v1564 = vpop.permute.xlu0 %1563
        %1565 = vrot.lane.b32.xlu0 %v670, 6
        %v1566 = vpop.permute.xlu0 %1565
        %vm1567 = vcmask 48128
        %v1568 = vsel %vm1567, %v1544, %v1546
        %v1569 = vsel %vm1567, %v1546, %v1548
        %v1570 = vsel %vm1567, %v1548, %v1532
        %v1571 = vsel %vm1567, %v1550, %v1552
        %v1572 = vsel %vm1567, %v1552, %v1554
        %v1573 = vsel %vm1567, %v1554, %v1534
        %v1574 = vsel %vm1567, %v1556, %v1558
        %v1575 = vsel %vm1567, %v1558, %v1560
        %v1576 = vsel %vm1567, %v1560, %v1536
        %v1577 = vsel %vm1567, %v1562, %v1564
        %v1578 = vsel %vm1567, %v1564, %v1566
        %v1579 = vsel %vm1567, %v1566, %v1538
        %v1596 = vsel %vm1567, %v1532, %v1544
        %v1597 = vsel %vm1567, %v1534, %v1550
        %v1598 = vsel %vm1567, %v1536, %v1556
        %v1599 = vsel %vm1567, %v1538, %v1562
        %vm1600 = vcmp.ge.f32.partialorder %v332, 6.0
        %v1601 = vsel %vm1600, 1, 0
        %v1602 = vcvt.s32.f32 %v1601
        %1603 = vset.pattern.permute.xlu0 6
        %1604 = vperm.xlu0 %1603, %v674
        %v1605 = vpop.permute.xlu0 %1604
        %1607 = vset.pattern.permute.xlu0 6
        %1608 = vperm.xlu0 %1607, %v675
        %v1609 = vpop.permute.xlu0 %1608
        %1611 = vset.pattern.permute.xlu0 6
        %1612 = vperm.xlu0 %1611, %v676
        %v1613 = vpop.permute.xlu0 %1612
        %1615 = vset.pattern.permute.xlu0 6
        %1616 = vperm.xlu0 %1615, %v677
        %v1617 = vpop.permute.xlu0 %1616
        %v1619 = vmul.f32 %v1596, %v1605
        %v1620 = vmul.f32 %v1568, %v1605
        %v1621 = vmul.f32 %v1569, %v1605
        %v1622 = vmul.f32 %v1570, %v1605
        %v1623 = vmul.f32 %v1597, %v1609
        %v1624 = vmul.f32 %v1571, %v1609
        %v1625 = vmul.f32 %v1572, %v1609
        %v1626 = vmul.f32 %v1573, %v1609
        %v1627 = vmul.f32 %v1598, %v1613
        %v1628 = vmul.f32 %v1574, %v1613
        %v1629 = vmul.f32 %v1575, %v1613
        %v1630 = vmul.f32 %v1576, %v1613
        %v1631 = vmul.f32 %v1599, %v1617
        %v1632 = vmul.f32 %v1577, %v1617
        %v1633 = vmul.f32 %v1578, %v1617
        %v1634 = vmul.f32 %v1579, %v1617
        %v1636 = vlaneseq
        %v1637 = vshrl.u32 %v1636, 7
        %v1638 = vsub.s32 0, %v1637
        %v1639 = vrot.slane %v1602, %v1638
        %v1640 = vlaneseq
        %v1641 = vshrl.u32 %v1640, 7
        %v1642 = vsub.s32 1, %v1641
        %v1643 = vrot.slane %v1602, %v1642
        %v1644 = vlaneseq
        %v1645 = vshrl.u32 %v1644, 7
        %v1646 = vsub.s32 2, %v1645
        %v1647 = vrot.slane %v1602, %v1646
        %v1648 = vlaneseq
        %v1649 = vshrl.u32 %v1648, 7
        %v1650 = vsub.s32 3, %v1649
        %v1651 = vrot.slane %v1602, %v1650
        %v1656 = vmul.f32 %v1619, %v1639
        %v1657 = vmul.f32 %v1620, %v1643
        %v1658 = vmul.f32 %v1621, %v1647
        %v1659 = vmul.f32 %v1622, %v1651
        %v1660 = vmul.f32 %v1623, %v1639
        %v1661 = vmul.f32 %v1624, %v1643
        %v1662 = vmul.f32 %v1625, %v1647
        %v1663 = vmul.f32 %v1626, %v1651
        %v1664 = vmul.f32 %v1627, %v1639
        %v1665 = vmul.f32 %v1628, %v1643
        %v1666 = vmul.f32 %v1629, %v1647
        %v1667 = vmul.f32 %v1630, %v1651
        %v1668 = vmul.f32 %v1631, %v1639
        %v1669 = vmul.f32 %v1632, %v1643
        %v1670 = vmul.f32 %v1633, %v1647
        %v1671 = vmul.f32 %v1634, %v1651
        %v1672 = vadd.f32 %v1515, %v1656
        %v1673 = vadd.f32 %v1516, %v1657
        %v1674 = vadd.f32 %v1517, %v1658
        %v1675 = vadd.f32 %v1518, %v1659
        %v1676 = vadd.f32 %v1519, %v1660
        %v1677 = vadd.f32 %v1520, %v1661
        %v1678 = vadd.f32 %v1521, %v1662
        %v1679 = vadd.f32 %v1522, %v1663
        %v1680 = vadd.f32 %v1523, %v1664
        %v1681 = vadd.f32 %v1524, %v1665
        %v1682 = vadd.f32 %v1525, %v1666
        %v1683 = vadd.f32 %v1526, %v1667
        %v1684 = vadd.f32 %v1527, %v1668
        %v1685 = vadd.f32 %v1528, %v1669
        %v1686 = vadd.f32 %v1529, %v1670
        %v1687 = vadd.f32 %v1530, %v1671
        %1688 = vrot.lane.b32.xlu0 %v658, 7
        %v1689 = vpop.permute.xlu0 %1688
        %1690 = vrot.lane.b32.xlu0 %v662, 7
        %v1691 = vpop.permute.xlu0 %1690
        %1692 = vrot.lane.b32.xlu0 %v668, 7
        %v1693 = vpop.permute.xlu0 %1692
        %1694 = vrot.lane.b32.xlu0 %v672, 7
        %v1695 = vpop.permute.xlu0 %1694
        %1700 = vrot.lane.b32.xlu0 %v603, 7
        %v1701 = vpop.permute.xlu0 %1700
        %1702 = vrot.lane.b32.xlu0 %v605, 7
        %v1703 = vpop.permute.xlu0 %1702
        %1704 = vrot.lane.b32.xlu0 %v656, 7
        %v1705 = vpop.permute.xlu0 %1704
        %1706 = vrot.lane.b32.xlu0 %v607, 7
        %v1707 = vpop.permute.xlu0 %1706
        %1708 = vrot.lane.b32.xlu0 %v609, 7
        %v1709 = vpop.permute.xlu0 %1708
        %1710 = vrot.lane.b32.xlu0 %v660, 7
        %v1711 = vpop.permute.xlu0 %1710
        %1712 = vrot.lane.b32.xlu0 %v613, 7
        %v1713 = vpop.permute.xlu0 %1712
        %1714 = vrot.lane.b32.xlu0 %v615, 7
        %v1715 = vpop.permute.xlu0 %1714
        %1716 = vrot.lane.b32.xlu0 %v666, 7
        %v1717 = vpop.permute.xlu0 %1716
        %1718 = vrot.lane.b32.xlu0 %v617, 7
        %v1719 = vpop.permute.xlu0 %1718
        %1720 = vrot.lane.b32.xlu0 %v619, 7
        %v1721 = vpop.permute.xlu0 %1720
        %1722 = vrot.lane.b32.xlu0 %v670, 7
        %v1723 = vpop.permute.xlu0 %1722
        %vm1724 = vcmask 56320
        %v1725 = vsel %vm1724, %v1701, %v1703
        %v1726 = vsel %vm1724, %v1703, %v1705
        %v1727 = vsel %vm1724, %v1705, %v1689
        %v1728 = vsel %vm1724, %v1707, %v1709
        %v1729 = vsel %vm1724, %v1709, %v1711
        %v1730 = vsel %vm1724, %v1711, %v1691
        %v1731 = vsel %vm1724, %v1713, %v1715
        %v1732 = vsel %vm1724, %v1715, %v1717
        %v1733 = vsel %vm1724, %v1717, %v1693
        %v1734 = vsel %vm1724, %v1719, %v1721
        %v1735 = vsel %vm1724, %v1721, %v1723
        %v1736 = vsel %vm1724, %v1723, %v1695
        %v1753 = vsel %vm1724, %v1689, %v1701
        %v1754 = vsel %vm1724, %v1691, %v1707
        %v1755 = vsel %vm1724, %v1693, %v1713
        %v1756 = vsel %vm1724, %v1695, %v1719
        %vm1757 = vcmp.ge.f32.partialorder %v332, 7.0
        %v1758 = vsel %vm1757, 1, 0
        %v1759 = vcvt.s32.f32 %v1758
        %1760 = vset.pattern.permute.xlu0 7
        %1761 = vperm.xlu0 %1760, %v674
        %v1762 = vpop.permute.xlu0 %1761
        %1764 = vset.pattern.permute.xlu0 7
        %1765 = vperm.xlu0 %1764, %v675
        %v1766 = vpop.permute.xlu0 %1765
        %1768 = vset.pattern.permute.xlu0 7
        %1769 = vperm.xlu0 %1768, %v676
        %v1770 = vpop.permute.xlu0 %1769
        %1772 = vset.pattern.permute.xlu0 7
        %1773 = vperm.xlu0 %1772, %v677
        %v1774 = vpop.permute.xlu0 %1773
        %v1776 = vmul.f32 %v1753, %v1762
        %v1777 = vmul.f32 %v1725, %v1762
        %v1778 = vmul.f32 %v1726, %v1762
        %v1779 = vmul.f32 %v1727, %v1762
        %v1780 = vmul.f32 %v1754, %v1766
        %v1781 = vmul.f32 %v1728, %v1766
        %v1782 = vmul.f32 %v1729, %v1766
        %v1783 = vmul.f32 %v1730, %v1766
        %v1784 = vmul.f32 %v1755, %v1770
        %v1785 = vmul.f32 %v1731, %v1770
        %v1786 = vmul.f32 %v1732, %v1770
        %v1787 = vmul.f32 %v1733, %v1770
        %v1788 = vmul.f32 %v1756, %v1774
        %v1789 = vmul.f32 %v1734, %v1774
        %v1790 = vmul.f32 %v1735, %v1774
        %v1791 = vmul.f32 %v1736, %v1774
        %v1793 = vlaneseq
        %v1794 = vshrl.u32 %v1793, 7
        %v1795 = vsub.s32 0, %v1794
        %v1796 = vrot.slane %v1759, %v1795
        %v1797 = vlaneseq
        %v1798 = vshrl.u32 %v1797, 7
        %v1799 = vsub.s32 1, %v1798
        %v1800 = vrot.slane %v1759, %v1799
        %v1801 = vlaneseq
        %v1802 = vshrl.u32 %v1801, 7
        %v1803 = vsub.s32 2, %v1802
        %v1804 = vrot.slane %v1759, %v1803
        %v1805 = vlaneseq
        %v1806 = vshrl.u32 %v1805, 7
        %v1807 = vsub.s32 3, %v1806
        %v1808 = vrot.slane %v1759, %v1807
        %v1813 = vmul.f32 %v1776, %v1796
        %v1814 = vmul.f32 %v1777, %v1800
        %v1815 = vmul.f32 %v1778, %v1804
        %v1816 = vmul.f32 %v1779, %v1808
        %v1817 = vmul.f32 %v1780, %v1796
        %v1818 = vmul.f32 %v1781, %v1800
        %v1819 = vmul.f32 %v1782, %v1804
        %v1820 = vmul.f32 %v1783, %v1808
        %v1821 = vmul.f32 %v1784, %v1796
        %v1822 = vmul.f32 %v1785, %v1800
        %v1823 = vmul.f32 %v1786, %v1804
        %v1824 = vmul.f32 %v1787, %v1808
        %v1825 = vmul.f32 %v1788, %v1796
        %v1826 = vmul.f32 %v1789, %v1800
        %v1827 = vmul.f32 %v1790, %v1804
        %v1828 = vmul.f32 %v1791, %v1808
        %v1829 = vadd.f32 %v1672, %v1813
        %v1830 = vadd.f32 %v1673, %v1814
        %v1831 = vadd.f32 %v1674, %v1815
        %v1832 = vadd.f32 %v1675, %v1816
        %v1833 = vadd.f32 %v1676, %v1817
        %v1834 = vadd.f32 %v1677, %v1818
        %v1835 = vadd.f32 %v1678, %v1819
        %v1836 = vadd.f32 %v1679, %v1820
        %v1837 = vadd.f32 %v1680, %v1821
        %v1838 = vadd.f32 %v1681, %v1822
        %v1839 = vadd.f32 %v1682, %v1823
        %v1840 = vadd.f32 %v1683, %v1824
        %v1841 = vadd.f32 %v1684, %v1825
        %v1842 = vadd.f32 %v1685, %v1826
        %v1843 = vadd.f32 %v1686, %v1827
        %v1844 = vadd.f32 %v1687, %v1828
        %1845 = vrot.lane.b32.xlu0 %v658, 8
        %v1846 = vpop.permute.xlu0 %1845
        %1847 = vrot.lane.b32.xlu0 %v662, 8
        %v1848 = vpop.permute.xlu0 %1847
        %1849 = vrot.lane.b32.xlu0 %v668, 8
        %v1850 = vpop.permute.xlu0 %1849
        %1851 = vrot.lane.b32.xlu0 %v672, 8
        %v1852 = vpop.permute.xlu0 %1851
        %1857 = vrot.lane.b32.xlu0 %v603, 8
        %v1858 = vpop.permute.xlu0 %1857
        %1859 = vrot.lane.b32.xlu0 %v605, 8
        %v1860 = vpop.permute.xlu0 %1859
        %1861 = vrot.lane.b32.xlu0 %v656, 8
        %v1862 = vpop.permute.xlu0 %1861
        %1863 = vrot.lane.b32.xlu0 %v607, 8
        %v1864 = vpop.permute.xlu0 %1863
        %1865 = vrot.lane.b32.xlu0 %v609, 8
        %v1866 = vpop.permute.xlu0 %1865
        %1867 = vrot.lane.b32.xlu0 %v660, 8
        %v1868 = vpop.permute.xlu0 %1867
        %1869 = vrot.lane.b32.xlu0 %v613, 8
        %v1870 = vpop.permute.xlu0 %1869
        %1871 = vrot.lane.b32.xlu0 %v615, 8
        %v1872 = vpop.permute.xlu0 %1871
        %1873 = vrot.lane.b32.xlu0 %v666, 8
        %v1874 = vpop.permute.xlu0 %1873
        %1875 = vrot.lane.b32.xlu0 %v617, 8
        %v1876 = vpop.permute.xlu0 %1875
        %1877 = vrot.lane.b32.xlu0 %v619, 8
        %v1878 = vpop.permute.xlu0 %1877
        %1879 = vrot.lane.b32.xlu0 %v670, 8
        %v1880 = vpop.permute.xlu0 %1879
        %vm1881 = vcmask 64512
        %v1882 = vsel %vm1881, %v1858, %v1860
        %v1883 = vsel %vm1881, %v1860, %v1862
        %v1884 = vsel %vm1881, %v1862, %v1846
        %v1885 = vsel %vm1881, %v1864, %v1866
        %v1886 = vsel %vm1881, %v1866, %v1868
        %v1887 = vsel %vm1881, %v1868, %v1848
        %v1888 = vsel %vm1881, %v1870, %v1872
        %v1889 = vsel %vm1881, %v1872, %v1874
        %v1890 = vsel %vm1881, %v1874, %v1850
        %v1891 = vsel %vm1881, %v1876, %v1878
        %v1892 = vsel %vm1881, %v1878, %v1880
        %v1893 = vsel %vm1881, %v1880, %v1852
        %v1910 = vsel %vm1881, %v1846, %v1858
        %v1911 = vsel %vm1881, %v1848, %v1864
        %v1912 = vsel %vm1881, %v1850, %v1870
        %v1913 = vsel %vm1881, %v1852, %v1876
        %vm1914 = vcmp.ge.f32.partialorder %v332, 8.0
        %v1915 = vsel %vm1914, 1, 0
        %v1916 = vcvt.s32.f32 %v1915
        %1917 = vset.pattern.permute.xlu0 8
        %1918 = vperm.xlu0 %1917, %v674
        %v1919 = vpop.permute.xlu0 %1918
        %1921 = vset.pattern.permute.xlu0 8
        %1922 = vperm.xlu0 %1921, %v675
        %v1923 = vpop.permute.xlu0 %1922
        %1925 = vset.pattern.permute.xlu0 8
        %1926 = vperm.xlu0 %1925, %v676
        %v1927 = vpop.permute.xlu0 %1926
        %1929 = vset.pattern.permute.xlu0 8
        %1930 = vperm.xlu0 %1929, %v677
        %v1931 = vpop.permute.xlu0 %1930
        %v1933 = vmul.f32 %v1910, %v1919
        %v1934 = vmul.f32 %v1882, %v1919
        %v1935 = vmul.f32 %v1883, %v1919
        %v1936 = vmul.f32 %v1884, %v1919
        %v1937 = vmul.f32 %v1911, %v1923
        %v1938 = vmul.f32 %v1885, %v1923
        %v1939 = vmul.f32 %v1886, %v1923
        %v1940 = vmul.f32 %v1887, %v1923
        %v1941 = vmul.f32 %v1912, %v1927
        %v1942 = vmul.f32 %v1888, %v1927
        %v1943 = vmul.f32 %v1889, %v1927
        %v1944 = vmul.f32 %v1890, %v1927
        %v1945 = vmul.f32 %v1913, %v1931
        %v1946 = vmul.f32 %v1891, %v1931
        %v1947 = vmul.f32 %v1892, %v1931
        %v1948 = vmul.f32 %v1893, %v1931
        %v1950 = vlaneseq
        %v1951 = vshrl.u32 %v1950, 7
        %v1952 = vsub.s32 0, %v1951
        %v1953 = vrot.slane %v1916, %v1952
        %v1954 = vlaneseq
        %v1955 = vshrl.u32 %v1954, 7
        %v1956 = vsub.s32 1, %v1955
        %v1957 = vrot.slane %v1916, %v1956
        %v1958 = vlaneseq
        %v1959 = vshrl.u32 %v1958, 7
        %v1960 = vsub.s32 2, %v1959
        %v1961 = vrot.slane %v1916, %v1960
        %v1962 = vlaneseq
        %v1963 = vshrl.u32 %v1962, 7
        %v1964 = vsub.s32 3, %v1963
        %v1965 = vrot.slane %v1916, %v1964
        %v1970 = vmul.f32 %v1933, %v1953
        %v1971 = vmul.f32 %v1934, %v1957
        %v1972 = vmul.f32 %v1935, %v1961
        %v1973 = vmul.f32 %v1936, %v1965
        %v1974 = vmul.f32 %v1937, %v1953
        %v1975 = vmul.f32 %v1938, %v1957
        %v1976 = vmul.f32 %v1939, %v1961
        %v1977 = vmul.f32 %v1940, %v1965
        %v1978 = vmul.f32 %v1941, %v1953
        %v1979 = vmul.f32 %v1942, %v1957
        %v1980 = vmul.f32 %v1943, %v1961
        %v1981 = vmul.f32 %v1944, %v1965
        %v1982 = vmul.f32 %v1945, %v1953
        %v1983 = vmul.f32 %v1946, %v1957
        %v1984 = vmul.f32 %v1947, %v1961
        %v1985 = vmul.f32 %v1948, %v1965
        %v1986 = vadd.f32 %v1829, %v1970
        %v1987 = vadd.f32 %v1830, %v1971
        %v1988 = vadd.f32 %v1831, %v1972
        %v1989 = vadd.f32 %v1832, %v1973
        %v1990 = vadd.f32 %v1833, %v1974
        %v1991 = vadd.f32 %v1834, %v1975
        %v1992 = vadd.f32 %v1835, %v1976
        %v1993 = vadd.f32 %v1836, %v1977
        %v1994 = vadd.f32 %v1837, %v1978
        %v1995 = vadd.f32 %v1838, %v1979
        %v1996 = vadd.f32 %v1839, %v1980
        %v1997 = vadd.f32 %v1840, %v1981
        %v1998 = vadd.f32 %v1841, %v1982
        %v1999 = vadd.f32 %v1842, %v1983
        %v2000 = vadd.f32 %v1843, %v1984
        %v2001 = vadd.f32 %v1844, %v1985
        %2002 = vrot.lane.b32.xlu0 %v658, 9
        %v2003 = vpop.permute.xlu0 %2002
        %2004 = vrot.lane.b32.xlu0 %v662, 9
        %v2005 = vpop.permute.xlu0 %2004
        %2006 = vrot.lane.b32.xlu0 %v668, 9
        %v2007 = vpop.permute.xlu0 %2006
        %2008 = vrot.lane.b32.xlu0 %v672, 9
        %v2009 = vpop.permute.xlu0 %2008
        %2014 = vrot.lane.b32.xlu0 %v603, 9
        %v2015 = vpop.permute.xlu0 %2014
        %2016 = vrot.lane.b32.xlu0 %v605, 9
        %v2017 = vpop.permute.xlu0 %2016
        %2018 = vrot.lane.b32.xlu0 %v656, 9
        %v2019 = vpop.permute.xlu0 %2018
        %2020 = vrot.lane.b32.xlu0 %v607, 9
        %v2021 = vpop.permute.xlu0 %2020
        %2022 = vrot.lane.b32.xlu0 %v609, 9
        %v2023 = vpop.permute.xlu0 %2022
        %2024 = vrot.lane.b32.xlu0 %v660, 9
        %v2025 = vpop.permute.xlu0 %2024
        %2026 = vrot.lane.b32.xlu0 %v613, 9
        %v2027 = vpop.permute.xlu0 %2026
        %2028 = vrot.lane.b32.xlu0 %v615, 9
        %v2029 = vpop.permute.xlu0 %2028
        %2030 = vrot.lane.b32.xlu0 %v666, 9
        %v2031 = vpop.permute.xlu0 %2030
        %2032 = vrot.lane.b32.xlu0 %v617, 9
        %v2033 = vpop.permute.xlu0 %2032
        %2034 = vrot.lane.b32.xlu0 %v619, 9
        %v2035 = vpop.permute.xlu0 %2034
        %2036 = vrot.lane.b32.xlu0 %v670, 9
        %v2037 = vpop.permute.xlu0 %2036
        %vm2038 = vcmask 72704
        %v2039 = vsel %vm2038, %v2015, %v2017
        %v2040 = vsel %vm2038, %v2017, %v2019
        %v2041 = vsel %vm2038, %v2019, %v2003
        %v2042 = vsel %vm2038, %v2021, %v2023
        %v2043 = vsel %vm2038, %v2023, %v2025
        %v2044 = vsel %vm2038, %v2025, %v2005
        %v2045 = vsel %vm2038, %v2027, %v2029
        %v2046 = vsel %vm2038, %v2029, %v2031
        %v2047 = vsel %vm2038, %v2031, %v2007
        %v2048 = vsel %vm2038, %v2033, %v2035
        %v2049 = vsel %vm2038, %v2035, %v2037
        %v2050 = vsel %vm2038, %v2037, %v2009
        %v2067 = vsel %vm2038, %v2003, %v2015
        %v2068 = vsel %vm2038, %v2005, %v2021
        %v2069 = vsel %vm2038, %v2007, %v2027
        %v2070 = vsel %vm2038, %v2009, %v2033
        %vm2071 = vcmp.ge.f32.partialorder %v332, 9.0
        %v2072 = vsel %vm2071, 1, 0
        %v2073 = vcvt.s32.f32 %v2072
        %2074 = vset.pattern.permute.xlu0 9
        %2075 = vperm.xlu0 %2074, %v674
        %v2076 = vpop.permute.xlu0 %2075
        %2078 = vset.pattern.permute.xlu0 9
        %2079 = vperm.xlu0 %2078, %v675
        %v2080 = vpop.permute.xlu0 %2079
        %2082 = vset.pattern.permute.xlu0 9
        %2083 = vperm.xlu0 %2082, %v676
        %v2084 = vpop.permute.xlu0 %2083
        %2086 = vset.pattern.permute.xlu0 9
        %2087 = vperm.xlu0 %2086, %v677
        %v2088 = vpop.permute.xlu0 %2087
        %v2090 = vmul.f32 %v2067, %v2076
        %v2091 = vmul.f32 %v2039, %v2076
        %v2092 = vmul.f32 %v2040, %v2076
        %v2093 = vmul.f32 %v2041, %v2076
        %v2094 = vmul.f32 %v2068, %v2080
        %v2095 = vmul.f32 %v2042, %v2080
        %v2096 = vmul.f32 %v2043, %v2080
        %v2097 = vmul.f32 %v2044, %v2080
        %v2098 = vmul.f32 %v2069, %v2084
        %v2099 = vmul.f32 %v2045, %v2084
        %v2100 = vmul.f32 %v2046, %v2084
        %v2101 = vmul.f32 %v2047, %v2084
        %v2102 = vmul.f32 %v2070, %v2088
        %v2103 = vmul.f32 %v2048, %v2088
        %v2104 = vmul.f32 %v2049, %v2088
        %v2105 = vmul.f32 %v2050, %v2088
        %v2107 = vlaneseq
        %v2108 = vshrl.u32 %v2107, 7
        %v2109 = vsub.s32 0, %v2108
        %v2110 = vrot.slane %v2073, %v2109
        %v2111 = vlaneseq
        %v2112 = vshrl.u32 %v2111, 7
        %v2113 = vsub.s32 1, %v2112
        %v2114 = vrot.slane %v2073, %v2113
        %v2115 = vlaneseq
        %v2116 = vshrl.u32 %v2115, 7
        %v2117 = vsub.s32 2, %v2116
        %v2118 = vrot.slane %v2073, %v2117
        %v2119 = vlaneseq
        %v2120 = vshrl.u32 %v2119, 7
        %v2121 = vsub.s32 3, %v2120
        %v2122 = vrot.slane %v2073, %v2121
        %v2127 = vmul.f32 %v2090, %v2110
        %v2128 = vmul.f32 %v2091, %v2114
        %v2129 = vmul.f32 %v2092, %v2118
        %v2130 = vmul.f32 %v2093, %v2122
        %v2131 = vmul.f32 %v2094, %v2110
        %v2132 = vmul.f32 %v2095, %v2114
        %v2133 = vmul.f32 %v2096, %v2118
        %v2134 = vmul.f32 %v2097, %v2122
        %v2135 = vmul.f32 %v2098, %v2110
        %v2136 = vmul.f32 %v2099, %v2114
        %v2137 = vmul.f32 %v2100, %v2118
        %v2138 = vmul.f32 %v2101, %v2122
        %v2139 = vmul.f32 %v2102, %v2110
        %v2140 = vmul.f32 %v2103, %v2114
        %v2141 = vmul.f32 %v2104, %v2118
        %v2142 = vmul.f32 %v2105, %v2122
        %v2143 = vadd.f32 %v1986, %v2127
        %v2144 = vadd.f32 %v1987, %v2128
        %v2145 = vadd.f32 %v1988, %v2129
        %v2146 = vadd.f32 %v1989, %v2130
        %v2147 = vadd.f32 %v1990, %v2131
        %v2148 = vadd.f32 %v1991, %v2132
        %v2149 = vadd.f32 %v1992, %v2133
        %v2150 = vadd.f32 %v1993, %v2134
        %v2151 = vadd.f32 %v1994, %v2135
        %v2152 = vadd.f32 %v1995, %v2136
        %v2153 = vadd.f32 %v1996, %v2137
        %v2154 = vadd.f32 %v1997, %v2138
        %v2155 = vadd.f32 %v1998, %v2139
        %v2156 = vadd.f32 %v1999, %v2140
        %v2157 = vadd.f32 %v2000, %v2141
        %v2158 = vadd.f32 %v2001, %v2142
        %2159 = vrot.lane.b32.xlu0 %v658, 10
        %v2160 = vpop.permute.xlu0 %2159
        %2161 = vrot.lane.b32.xlu0 %v662, 10
        %v2162 = vpop.permute.xlu0 %2161
        %2163 = vrot.lane.b32.xlu0 %v668, 10
        %v2164 = vpop.permute.xlu0 %2163
        %2165 = vrot.lane.b32.xlu0 %v672, 10
        %v2166 = vpop.permute.xlu0 %2165
        %2171 = vrot.lane.b32.xlu0 %v603, 10
        %v2172 = vpop.permute.xlu0 %2171
        %2173 = vrot.lane.b32.xlu0 %v605, 10
        %v2174 = vpop.permute.xlu0 %2173
        %2175 = vrot.lane.b32.xlu0 %v656, 10
        %v2176 = vpop.permute.xlu0 %2175
        %2177 = vrot.lane.b32.xlu0 %v607, 10
        %v2178 = vpop.permute.xlu0 %2177
        %2179 = vrot.lane.b32.xlu0 %v609, 10
        %v2180 = vpop.permute.xlu0 %2179
        %2181 = vrot.lane.b32.xlu0 %v660, 10
        %v2182 = vpop.permute.xlu0 %2181
        %2183 = vrot.lane.b32.xlu0 %v613, 10
        %v2184 = vpop.permute.xlu0 %2183
        %2185 = vrot.lane.b32.xlu0 %v615, 10
        %v2186 = vpop.permute.xlu0 %2185
        %2187 = vrot.lane.b32.xlu0 %v666, 10
        %v2188 = vpop.permute.xlu0 %2187
        %2189 = vrot.lane.b32.xlu0 %v617, 10
        %v2190 = vpop.permute.xlu0 %2189
        %2191 = vrot.lane.b32.xlu0 %v619, 10
        %v2192 = vpop.permute.xlu0 %2191
        %2193 = vrot.lane.b32.xlu0 %v670, 10
        %v2194 = vpop.permute.xlu0 %2193
        %vm2195 = vcmask 80896
        %v2196 = vsel %vm2195, %v2172, %v2174
        %v2197 = vsel %vm2195, %v2174, %v2176
        %v2198 = vsel %vm2195, %v2176, %v2160
        %v2199 = vsel %vm2195, %v2178, %v2180
        %v2200 = vsel %vm2195, %v2180, %v2182
        %v2201 = vsel %vm2195, %v2182, %v2162
        %v2202 = vsel %vm2195, %v2184, %v2186
        %v2203 = vsel %vm2195, %v2186, %v2188
        %v2204 = vsel %vm2195, %v2188, %v2164
        %v2205 = vsel %vm2195, %v2190, %v2192
        %v2206 = vsel %vm2195, %v2192, %v2194
        %v2207 = vsel %vm2195, %v2194, %v2166
        %v2224 = vsel %vm2195, %v2160, %v2172
        %v2225 = vsel %vm2195, %v2162, %v2178
        %v2226 = vsel %vm2195, %v2164, %v2184
        %v2227 = vsel %vm2195, %v2166, %v2190
        %vm2228 = vcmp.ge.f32.partialorder %v332, 10.0
        %v2229 = vsel %vm2228, 1, 0
        %v2230 = vcvt.s32.f32 %v2229
        %2231 = vset.pattern.permute.xlu0 10
        %2232 = vperm.xlu0 %2231, %v674
        %v2233 = vpop.permute.xlu0 %2232
        %2235 = vset.pattern.permute.xlu0 10
        %2236 = vperm.xlu0 %2235, %v675
        %v2237 = vpop.permute.xlu0 %2236
        %2239 = vset.pattern.permute.xlu0 10
        %2240 = vperm.xlu0 %2239, %v676
        %v2241 = vpop.permute.xlu0 %2240
        %2243 = vset.pattern.permute.xlu0 10
        %2244 = vperm.xlu0 %2243, %v677
        %v2245 = vpop.permute.xlu0 %2244
        %v2247 = vmul.f32 %v2224, %v2233
        %v2248 = vmul.f32 %v2196, %v2233
        %v2249 = vmul.f32 %v2197, %v2233
        %v2250 = vmul.f32 %v2198, %v2233
        %v2251 = vmul.f32 %v2225, %v2237
        %v2252 = vmul.f32 %v2199, %v2237
        %v2253 = vmul.f32 %v2200, %v2237
        %v2254 = vmul.f32 %v2201, %v2237
        %v2255 = vmul.f32 %v2226, %v2241
        %v2256 = vmul.f32 %v2202, %v2241
        %v2257 = vmul.f32 %v2203, %v2241
        %v2258 = vmul.f32 %v2204, %v2241
        %v2259 = vmul.f32 %v2227, %v2245
        %v2260 = vmul.f32 %v2205, %v2245
        %v2261 = vmul.f32 %v2206, %v2245
        %v2262 = vmul.f32 %v2207, %v2245
        %v2264 = vlaneseq
        %v2265 = vshrl.u32 %v2264, 7
        %v2266 = vsub.s32 0, %v2265
        %v2267 = vrot.slane %v2230, %v2266
        %v2268 = vlaneseq
        %v2269 = vshrl.u32 %v2268, 7
        %v2270 = vsub.s32 1, %v2269
        %v2271 = vrot.slane %v2230, %v2270
        %v2272 = vlaneseq
        %v2273 = vshrl.u32 %v2272, 7
        %v2274 = vsub.s32 2, %v2273
        %v2275 = vrot.slane %v2230, %v2274
        %v2276 = vlaneseq
        %v2277 = vshrl.u32 %v2276, 7
        %v2278 = vsub.s32 3, %v2277
        %v2279 = vrot.slane %v2230, %v2278
        %v2284 = vmul.f32 %v2247, %v2267
        %v2285 = vmul.f32 %v2248, %v2271
        %v2286 = vmul.f32 %v2249, %v2275
        %v2287 = vmul.f32 %v2250, %v2279
        %v2288 = vmul.f32 %v2251, %v2267
        %v2289 = vmul.f32 %v2252, %v2271
        %v2290 = vmul.f32 %v2253, %v2275
        %v2291 = vmul.f32 %v2254, %v2279
        %v2292 = vmul.f32 %v2255, %v2267
        %v2293 = vmul.f32 %v2256, %v2271
        %v2294 = vmul.f32 %v2257, %v2275
        %v2295 = vmul.f32 %v2258, %v2279
        %v2296 = vmul.f32 %v2259, %v2267
        %v2297 = vmul.f32 %v2260, %v2271
        %v2298 = vmul.f32 %v2261, %v2275
        %v2299 = vmul.f32 %v2262, %v2279
        %v2300 = vadd.f32 %v2143, %v2284
        %v2301 = vadd.f32 %v2144, %v2285
        %v2302 = vadd.f32 %v2145, %v2286
        %v2303 = vadd.f32 %v2146, %v2287
        %v2304 = vadd.f32 %v2147, %v2288
        %v2305 = vadd.f32 %v2148, %v2289
        %v2306 = vadd.f32 %v2149, %v2290
        %v2307 = vadd.f32 %v2150, %v2291
        %v2308 = vadd.f32 %v2151, %v2292
        %v2309 = vadd.f32 %v2152, %v2293
        %v2310 = vadd.f32 %v2153, %v2294
        %v2311 = vadd.f32 %v2154, %v2295
        %v2312 = vadd.f32 %v2155, %v2296
        %v2313 = vadd.f32 %v2156, %v2297
        %v2314 = vadd.f32 %v2157, %v2298
        %v2315 = vadd.f32 %v2158, %v2299
        %2316 = vrot.lane.b32.xlu0 %v658, 11
        %v2317 = vpop.permute.xlu0 %2316
        %2318 = vrot.lane.b32.xlu0 %v662, 11
        %v2319 = vpop.permute.xlu0 %2318
        %2320 = vrot.lane.b32.xlu0 %v668, 11
        %v2321 = vpop.permute.xlu0 %2320
        %2322 = vrot.lane.b32.xlu0 %v672, 11
        %v2323 = vpop.permute.xlu0 %2322
        %2328 = vrot.lane.b32.xlu0 %v603, 11
        %v2329 = vpop.permute.xlu0 %2328
        %2330 = vrot.lane.b32.xlu0 %v605, 11
        %v2331 = vpop.permute.xlu0 %2330
        %2332 = vrot.lane.b32.xlu0 %v656, 11
        %v2333 = vpop.permute.xlu0 %2332
        %2334 = vrot.lane.b32.xlu0 %v607, 11
        %v2335 = vpop.permute.xlu0 %2334
        %2336 = vrot.lane.b32.xlu0 %v609, 11
        %v2337 = vpop.permute.xlu0 %2336
        %2338 = vrot.lane.b32.xlu0 %v660, 11
        %v2339 = vpop.permute.xlu0 %2338
        %2340 = vrot.lane.b32.xlu0 %v613, 11
        %v2341 = vpop.permute.xlu0 %2340
        %2342 = vrot.lane.b32.xlu0 %v615, 11
        %v2343 = vpop.permute.xlu0 %2342
        %2344 = vrot.lane.b32.xlu0 %v666, 11
        %v2345 = vpop.permute.xlu0 %2344
        %2346 = vrot.lane.b32.xlu0 %v617, 11
        %v2347 = vpop.permute.xlu0 %2346
        %2348 = vrot.lane.b32.xlu0 %v619, 11
        %v2349 = vpop.permute.xlu0 %2348
        %2350 = vrot.lane.b32.xlu0 %v670, 11
        %v2351 = vpop.permute.xlu0 %2350
        %vm2352 = vcmask 89088
        %v2353 = vsel %vm2352, %v2329, %v2331
        %v2354 = vsel %vm2352, %v2331, %v2333
        %v2355 = vsel %vm2352, %v2333, %v2317
        %v2356 = vsel %vm2352, %v2335, %v2337
        %v2357 = vsel %vm2352, %v2337, %v2339
        %v2358 = vsel %vm2352, %v2339, %v2319
        %v2359 = vsel %vm2352, %v2341, %v2343
        %v2360 = vsel %vm2352, %v2343, %v2345
        %v2361 = vsel %vm2352, %v2345, %v2321
        %v2362 = vsel %vm2352, %v2347, %v2349
        %v2363 = vsel %vm2352, %v2349, %v2351
        %v2364 = vsel %vm2352, %v2351, %v2323
        %v2381 = vsel %vm2352, %v2317, %v2329
        %v2382 = vsel %vm2352, %v2319, %v2335
        %v2383 = vsel %vm2352, %v2321, %v2341
        %v2384 = vsel %vm2352, %v2323, %v2347
        %vm2385 = vcmp.ge.f32.partialorder %v332, 11.0
        %v2386 = vsel %vm2385, 1, 0
        %v2387 = vcvt.s32.f32 %v2386
        %2388 = vset.pattern.permute.xlu0 11
        %2389 = vperm.xlu0 %2388, %v674
        %v2390 = vpop.permute.xlu0 %2389
        %2392 = vset.pattern.permute.xlu0 11
        %2393 = vperm.xlu0 %2392, %v675
        %v2394 = vpop.permute.xlu0 %2393
        %2396 = vset.pattern.permute.xlu0 11
        %2397 = vperm.xlu0 %2396, %v676
        %v2398 = vpop.permute.xlu0 %2397
        %2400 = vset.pattern.permute.xlu0 11
        %2401 = vperm.xlu0 %2400, %v677
        %v2402 = vpop.permute.xlu0 %2401
        %v2404 = vmul.f32 %v2381, %v2390
        %v2405 = vmul.f32 %v2353, %v2390
        %v2406 = vmul.f32 %v2354, %v2390
        %v2407 = vmul.f32 %v2355, %v2390
        %v2408 = vmul.f32 %v2382, %v2394
        %v2409 = vmul.f32 %v2356, %v2394
        %v2410 = vmul.f32 %v2357, %v2394
        %v2411 = vmul.f32 %v2358, %v2394
        %v2412 = vmul.f32 %v2383, %v2398
        %v2413 = vmul.f32 %v2359, %v2398
        %v2414 = vmul.f32 %v2360, %v2398
        %v2415 = vmul.f32 %v2361, %v2398
        %v2416 = vmul.f32 %v2384, %v2402
        %v2417 = vmul.f32 %v2362, %v2402
        %v2418 = vmul.f32 %v2363, %v2402
        %v2419 = vmul.f32 %v2364, %v2402
        %v2421 = vlaneseq
        %v2422 = vshrl.u32 %v2421, 7
        %v2423 = vsub.s32 0, %v2422
        %v2424 = vrot.slane %v2387, %v2423
        %v2425 = vlaneseq
        %v2426 = vshrl.u32 %v2425, 7
        %v2427 = vsub.s32 1, %v2426
        %v2428 = vrot.slane %v2387, %v2427
        %v2429 = vlaneseq
        %v2430 = vshrl.u32 %v2429, 7
        %v2431 = vsub.s32 2, %v2430
        %v2432 = vrot.slane %v2387, %v2431
        %v2433 = vlaneseq
        %v2434 = vshrl.u32 %v2433, 7
        %v2435 = vsub.s32 3, %v2434
        %v2436 = vrot.slane %v2387, %v2435
        %v2441 = vmul.f32 %v2404, %v2424
        %v2442 = vmul.f32 %v2405, %v2428
        %v2443 = vmul.f32 %v2406, %v2432
        %v2444 = vmul.f32 %v2407, %v2436
        %v2445 = vmul.f32 %v2408, %v2424
        %v2446 = vmul.f32 %v2409, %v2428
        %v2447 = vmul.f32 %v2410, %v2432
        %v2448 = vmul.f32 %v2411, %v2436
        %v2449 = vmul.f32 %v2412, %v2424
        %v2450 = vmul.f32 %v2413, %v2428
        %v2451 = vmul.f32 %v2414, %v2432
        %v2452 = vmul.f32 %v2415, %v2436
        %v2453 = vmul.f32 %v2416, %v2424
        %v2454 = vmul.f32 %v2417, %v2428
        %v2455 = vmul.f32 %v2418, %v2432
        %v2456 = vmul.f32 %v2419, %v2436
        %v2457 = vadd.f32 %v2300, %v2441
        %v2458 = vadd.f32 %v2301, %v2442
        %v2459 = vadd.f32 %v2302, %v2443
        %v2460 = vadd.f32 %v2303, %v2444
        %v2461 = vadd.f32 %v2304, %v2445
        %v2462 = vadd.f32 %v2305, %v2446
        %v2463 = vadd.f32 %v2306, %v2447
        %v2464 = vadd.f32 %v2307, %v2448
        %v2465 = vadd.f32 %v2308, %v2449
        %v2466 = vadd.f32 %v2309, %v2450
        %v2467 = vadd.f32 %v2310, %v2451
        %v2468 = vadd.f32 %v2311, %v2452
        %v2469 = vadd.f32 %v2312, %v2453
        %v2470 = vadd.f32 %v2313, %v2454
        %v2471 = vadd.f32 %v2314, %v2455
        %v2472 = vadd.f32 %v2315, %v2456
        %2473 = vrot.lane.b32.xlu0 %v658, 12
        %v2474 = vpop.permute.xlu0 %2473
        %2475 = vrot.lane.b32.xlu0 %v662, 12
        %v2476 = vpop.permute.xlu0 %2475
        %2477 = vrot.lane.b32.xlu0 %v668, 12
        %v2478 = vpop.permute.xlu0 %2477
        %2479 = vrot.lane.b32.xlu0 %v672, 12
        %v2480 = vpop.permute.xlu0 %2479
        %2485 = vrot.lane.b32.xlu0 %v603, 12
        %v2486 = vpop.permute.xlu0 %2485
        %2487 = vrot.lane.b32.xlu0 %v605, 12
        %v2488 = vpop.permute.xlu0 %2487
        %2489 = vrot.lane.b32.xlu0 %v656, 12
        %v2490 = vpop.permute.xlu0 %2489
        %2491 = vrot.lane.b32.xlu0 %v607, 12
        %v2492 = vpop.permute.xlu0 %2491
        %2493 = vrot.lane.b32.xlu0 %v609, 12
        %v2494 = vpop.permute.xlu0 %2493
        %2495 = vrot.lane.b32.xlu0 %v660, 12
        %v2496 = vpop.permute.xlu0 %2495
        %2497 = vrot.lane.b32.xlu0 %v613, 12
        %v2498 = vpop.permute.xlu0 %2497
        %2499 = vrot.lane.b32.xlu0 %v615, 12
        %v2500 = vpop.permute.xlu0 %2499
        %2501 = vrot.lane.b32.xlu0 %v666, 12
        %v2502 = vpop.permute.xlu0 %2501
        %2503 = vrot.lane.b32.xlu0 %v617, 12
        %v2504 = vpop.permute.xlu0 %2503
        %2505 = vrot.lane.b32.xlu0 %v619, 12
        %v2506 = vpop.permute.xlu0 %2505
        %2507 = vrot.lane.b32.xlu0 %v670, 12
        %v2508 = vpop.permute.xlu0 %2507
        %vm2509 = vcmask 97280
        %v2510 = vsel %vm2509, %v2486, %v2488
        %v2511 = vsel %vm2509, %v2488, %v2490
        %v2512 = vsel %vm2509, %v2490, %v2474
        %v2513 = vsel %vm2509, %v2492, %v2494
        %v2514 = vsel %vm2509, %v2494, %v2496
        %v2515 = vsel %vm2509, %v2496, %v2476
        %v2516 = vsel %vm2509, %v2498, %v2500
        %v2517 = vsel %vm2509, %v2500, %v2502
        %v2518 = vsel %vm2509, %v2502, %v2478
        %v2519 = vsel %vm2509, %v2504, %v2506
        %v2520 = vsel %vm2509, %v2506, %v2508
        %v2521 = vsel %vm2509, %v2508, %v2480
        %v2538 = vsel %vm2509, %v2474, %v2486
        %v2539 = vsel %vm2509, %v2476, %v2492
        %v2540 = vsel %vm2509, %v2478, %v2498
        %v2541 = vsel %vm2509, %v2480, %v2504
        %vm2542 = vcmp.ge.f32.partialorder %v332, 12.0
        %v2543 = vsel %vm2542, 1, 0
        %v2544 = vcvt.s32.f32 %v2543
        %2545 = vset.pattern.permute.xlu0 12
        %2546 = vperm.xlu0 %2545, %v674
        %v2547 = vpop.permute.xlu0 %2546
        %2549 = vset.pattern.permute.xlu0 12
        %2550 = vperm.xlu0 %2549, %v675
        %v2551 = vpop.permute.xlu0 %2550
        %2553 = vset.pattern.permute.xlu0 12
        %2554 = vperm.xlu0 %2553, %v676
        %v2555 = vpop.permute.xlu0 %2554
        %2557 = vset.pattern.permute.xlu0 12
        %2558 = vperm.xlu0 %2557, %v677
        %v2559 = vpop.permute.xlu0 %2558
        %v2561 = vmul.f32 %v2538, %v2547
        %v2562 = vmul.f32 %v2510, %v2547
        %v2563 = vmul.f32 %v2511, %v2547
        %v2564 = vmul.f32 %v2512, %v2547
        %v2565 = vmul.f32 %v2539, %v2551
        %v2566 = vmul.f32 %v2513, %v2551
        %v2567 = vmul.f32 %v2514, %v2551
        %v2568 = vmul.f32 %v2515, %v2551
        %v2569 = vmul.f32 %v2540, %v2555
        %v2570 = vmul.f32 %v2516, %v2555
        %v2571 = vmul.f32 %v2517, %v2555
        %v2572 = vmul.f32 %v2518, %v2555
        %v2573 = vmul.f32 %v2541, %v2559
        %v2574 = vmul.f32 %v2519, %v2559
        %v2575 = vmul.f32 %v2520, %v2559
        %v2576 = vmul.f32 %v2521, %v2559
        %v2578 = vlaneseq
        %v2579 = vshrl.u32 %v2578, 7
        %v2580 = vsub.s32 0, %v2579
        %v2581 = vrot.slane %v2544, %v2580
        %v2582 = vlaneseq
        %v2583 = vshrl.u32 %v2582, 7
        %v2584 = vsub.s32 1, %v2583
        %v2585 = vrot.slane %v2544, %v2584
        %v2586 = vlaneseq
        %v2587 = vshrl.u32 %v2586, 7
        %v2588 = vsub.s32 2, %v2587
        %v2589 = vrot.slane %v2544, %v2588
        %v2590 = vlaneseq
        %v2591 = vshrl.u32 %v2590, 7
        %v2592 = vsub.s32 3, %v2591
        %v2593 = vrot.slane %v2544, %v2592
        %v2598 = vmul.f32 %v2561, %v2581
        %v2599 = vmul.f32 %v2562, %v2585
        %v2600 = vmul.f32 %v2563, %v2589
        %v2601 = vmul.f32 %v2564, %v2593
        %v2602 = vmul.f32 %v2565, %v2581
        %v2603 = vmul.f32 %v2566, %v2585
        %v2604 = vmul.f32 %v2567, %v2589
        %v2605 = vmul.f32 %v2568, %v2593
        %v2606 = vmul.f32 %v2569, %v2581
        %v2607 = vmul.f32 %v2570, %v2585
        %v2608 = vmul.f32 %v2571, %v2589
        %v2609 = vmul.f32 %v2572, %v2593
        %v2610 = vmul.f32 %v2573, %v2581
        %v2611 = vmul.f32 %v2574, %v2585
        %v2612 = vmul.f32 %v2575, %v2589
        %v2613 = vmul.f32 %v2576, %v2593
        %v2614 = vadd.f32 %v2457, %v2598
        %v2615 = vadd.f32 %v2458, %v2599
        %v2616 = vadd.f32 %v2459, %v2600
        %v2617 = vadd.f32 %v2460, %v2601
        %v2618 = vadd.f32 %v2461, %v2602
        %v2619 = vadd.f32 %v2462, %v2603
        %v2620 = vadd.f32 %v2463, %v2604
        %v2621 = vadd.f32 %v2464, %v2605
        %v2622 = vadd.f32 %v2465, %v2606
        %v2623 = vadd.f32 %v2466, %v2607
        %v2624 = vadd.f32 %v2467, %v2608
        %v2625 = vadd.f32 %v2468, %v2609
        %v2626 = vadd.f32 %v2469, %v2610
        %v2627 = vadd.f32 %v2470, %v2611
        %v2628 = vadd.f32 %v2471, %v2612
        %v2629 = vadd.f32 %v2472, %v2613
        %2630 = vrot.lane.b32.xlu0 %v658, 13
        %v2631 = vpop.permute.xlu0 %2630
        %2632 = vrot.lane.b32.xlu0 %v662, 13
        %v2633 = vpop.permute.xlu0 %2632
        %2634 = vrot.lane.b32.xlu0 %v668, 13
        %v2635 = vpop.permute.xlu0 %2634
        %2636 = vrot.lane.b32.xlu0 %v672, 13
        %v2637 = vpop.permute.xlu0 %2636
        %2642 = vrot.lane.b32.xlu0 %v603, 13
        %v2643 = vpop.permute.xlu0 %2642
        %2644 = vrot.lane.b32.xlu0 %v605, 13
        %v2645 = vpop.permute.xlu0 %2644
        %2646 = vrot.lane.b32.xlu0 %v656, 13
        %v2647 = vpop.permute.xlu0 %2646
        %2648 = vrot.lane.b32.xlu0 %v607, 13
        %v2649 = vpop.permute.xlu0 %2648
        %2650 = vrot.lane.b32.xlu0 %v609, 13
        %v2651 = vpop.permute.xlu0 %2650
        %2652 = vrot.lane.b32.xlu0 %v660, 13
        %v2653 = vpop.permute.xlu0 %2652
        %2654 = vrot.lane.b32.xlu0 %v613, 13
        %v2655 = vpop.permute.xlu0 %2654
        %2656 = vrot.lane.b32.xlu0 %v615, 13
        %v2657 = vpop.permute.xlu0 %2656
        %2658 = vrot.lane.b32.xlu0 %v666, 13
        %v2659 = vpop.permute.xlu0 %2658
        %2660 = vrot.lane.b32.xlu0 %v617, 13
        %v2661 = vpop.permute.xlu0 %2660
        %2662 = vrot.lane.b32.xlu0 %v619, 13
        %v2663 = vpop.permute.xlu0 %2662
        %2664 = vrot.lane.b32.xlu0 %v670, 13
        %v2665 = vpop.permute.xlu0 %2664
        %vm2666 = vcmask 105472
        %v2667 = vsel %vm2666, %v2643, %v2645
        %v2668 = vsel %vm2666, %v2645, %v2647
        %v2669 = vsel %vm2666, %v2647, %v2631
        %v2670 = vsel %vm2666, %v2649, %v2651
        %v2671 = vsel %vm2666, %v2651, %v2653
        %v2672 = vsel %vm2666, %v2653, %v2633
        %v2673 = vsel %vm2666, %v2655, %v2657
        %v2674 = vsel %vm2666, %v2657, %v2659
        %v2675 = vsel %vm2666, %v2659, %v2635
        %v2676 = vsel %vm2666, %v2661, %v2663
        %v2677 = vsel %vm2666, %v2663, %v2665
        %v2678 = vsel %vm2666, %v2665, %v2637
        %v2695 = vsel %vm2666, %v2631, %v2643
        %v2696 = vsel %vm2666, %v2633, %v2649
        %v2697 = vsel %vm2666, %v2635, %v2655
        %v2698 = vsel %vm2666, %v2637, %v2661
        %vm2699 = vcmp.ge.f32.partialorder %v332, 13.0
        %v2700 = vsel %vm2699, 1, 0
        %v2701 = vcvt.s32.f32 %v2700
        %2702 = vset.pattern.permute.xlu0 13
        %2703 = vperm.xlu0 %2702, %v674
        %v2704 = vpop.permute.xlu0 %2703
        %2706 = vset.pattern.permute.xlu0 13
        %2707 = vperm.xlu0 %2706, %v675
        %v2708 = vpop.permute.xlu0 %2707
        %2710 = vset.pattern.permute.xlu0 13
        %2711 = vperm.xlu0 %2710, %v676
        %v2712 = vpop.permute.xlu0 %2711
        %2714 = vset.pattern.permute.xlu0 13
        %2715 = vperm.xlu0 %2714, %v677
        %v2716 = vpop.permute.xlu0 %2715
        %v2718 = vmul.f32 %v2695, %v2704
        %v2719 = vmul.f32 %v2667, %v2704
        %v2720 = vmul.f32 %v2668, %v2704
        %v2721 = vmul.f32 %v2669, %v2704
        %v2722 = vmul.f32 %v2696, %v2708
        %v2723 = vmul.f32 %v2670, %v2708
        %v2724 = vmul.f32 %v2671, %v2708
        %v2725 = vmul.f32 %v2672, %v2708
        %v2726 = vmul.f32 %v2697, %v2712
        %v2727 = vmul.f32 %v2673, %v2712
        %v2728 = vmul.f32 %v2674, %v2712
        %v2729 = vmul.f32 %v2675, %v2712
        %v2730 = vmul.f32 %v2698, %v2716
        %v2731 = vmul.f32 %v2676, %v2716
        %v2732 = vmul.f32 %v2677, %v2716
        %v2733 = vmul.f32 %v2678, %v2716
        %v2735 = vlaneseq
        %v2736 = vshrl.u32 %v2735, 7
        %v2737 = vsub.s32 0, %v2736
        %v2738 = vrot.slane %v2701, %v2737
        %v2739 = vlaneseq
        %v2740 = vshrl.u32 %v2739, 7
        %v2741 = vsub.s32 1, %v2740
        %v2742 = vrot.slane %v2701, %v2741
        %v2743 = vlaneseq
        %v2744 = vshrl.u32 %v2743, 7
        %v2745 = vsub.s32 2, %v2744
        %v2746 = vrot.slane %v2701, %v2745
        %v2747 = vlaneseq
        %v2748 = vshrl.u32 %v2747, 7
        %v2749 = vsub.s32 3, %v2748
        %v2750 = vrot.slane %v2701, %v2749
        %v2755 = vmul.f32 %v2718, %v2738
        %v2756 = vmul.f32 %v2719, %v2742
        %v2757 = vmul.f32 %v2720, %v2746
        %v2758 = vmul.f32 %v2721, %v2750
        %v2759 = vmul.f32 %v2722, %v2738
        %v2760 = vmul.f32 %v2723, %v2742
        %v2761 = vmul.f32 %v2724, %v2746
        %v2762 = vmul.f32 %v2725, %v2750
        %v2763 = vmul.f32 %v2726, %v2738
        %v2764 = vmul.f32 %v2727, %v2742
        %v2765 = vmul.f32 %v2728, %v2746
        %v2766 = vmul.f32 %v2729, %v2750
        %v2767 = vmul.f32 %v2730, %v2738
        %v2768 = vmul.f32 %v2731, %v2742
        %v2769 = vmul.f32 %v2732, %v2746
        %v2770 = vmul.f32 %v2733, %v2750
        %v2771 = vadd.f32 %v2614, %v2755
        %v2772 = vadd.f32 %v2615, %v2756
        %v2773 = vadd.f32 %v2616, %v2757
        %v2774 = vadd.f32 %v2617, %v2758
        %v2775 = vadd.f32 %v2618, %v2759
        %v2776 = vadd.f32 %v2619, %v2760
        %v2777 = vadd.f32 %v2620, %v2761
        %v2778 = vadd.f32 %v2621, %v2762
        %v2779 = vadd.f32 %v2622, %v2763
        %v2780 = vadd.f32 %v2623, %v2764
        %v2781 = vadd.f32 %v2624, %v2765
        %v2782 = vadd.f32 %v2625, %v2766
        %v2783 = vadd.f32 %v2626, %v2767
        %v2784 = vadd.f32 %v2627, %v2768
        %v2785 = vadd.f32 %v2628, %v2769
        %v2786 = vadd.f32 %v2629, %v2770
        %2787 = vrot.lane.b32.xlu0 %v658, 14
        %v2788 = vpop.permute.xlu0 %2787
        %2789 = vrot.lane.b32.xlu0 %v662, 14
        %v2790 = vpop.permute.xlu0 %2789
        %2791 = vrot.lane.b32.xlu0 %v668, 14
        %v2792 = vpop.permute.xlu0 %2791
        %2793 = vrot.lane.b32.xlu0 %v672, 14
        %v2794 = vpop.permute.xlu0 %2793
        %2799 = vrot.lane.b32.xlu0 %v603, 14
        %v2800 = vpop.permute.xlu0 %2799
        %2801 = vrot.lane.b32.xlu0 %v605, 14
        %v2802 = vpop.permute.xlu0 %2801
        %2803 = vrot.lane.b32.xlu0 %v656, 14
        %v2804 = vpop.permute.xlu0 %2803
        %2805 = vrot.lane.b32.xlu0 %v607, 14
        %v2806 = vpop.permute.xlu0 %2805
        %2807 = vrot.lane.b32.xlu0 %v609, 14
        %v2808 = vpop.permute.xlu0 %2807
        %2809 = vrot.lane.b32.xlu0 %v660, 14
        %v2810 = vpop.permute.xlu0 %2809
        %2811 = vrot.lane.b32.xlu0 %v613, 14
        %v2812 = vpop.permute.xlu0 %2811
        %2813 = vrot.lane.b32.xlu0 %v615, 14
        %v2814 = vpop.permute.xlu0 %2813
        %2815 = vrot.lane.b32.xlu0 %v666, 14
        %v2816 = vpop.permute.xlu0 %2815
        %2817 = vrot.lane.b32.xlu0 %v617, 14
        %v2818 = vpop.permute.xlu0 %2817
        %2819 = vrot.lane.b32.xlu0 %v619, 14
        %v2820 = vpop.permute.xlu0 %2819
        %2821 = vrot.lane.b32.xlu0 %v670, 14
        %v2822 = vpop.permute.xlu0 %2821
        %vm2823 = vcmask 113664
        %v2824 = vsel %vm2823, %v2800, %v2802
        %v2825 = vsel %vm2823, %v2802, %v2804
        %v2826 = vsel %vm2823, %v2804, %v2788
        %v2827 = vsel %vm2823, %v2806, %v2808
        %v2828 = vsel %vm2823, %v2808, %v2810
        %v2829 = vsel %vm2823, %v2810, %v2790
        %v2830 = vsel %vm2823, %v2812, %v2814
        %v2831 = vsel %vm2823, %v2814, %v2816
        %v2832 = vsel %vm2823, %v2816, %v2792
        %v2833 = vsel %vm2823, %v2818, %v2820
        %v2834 = vsel %vm2823, %v2820, %v2822
        %v2835 = vsel %vm2823, %v2822, %v2794
        %v2852 = vsel %vm2823, %v2788, %v2800
        %v2853 = vsel %vm2823, %v2790, %v2806
        %v2854 = vsel %vm2823, %v2792, %v2812
        %v2855 = vsel %vm2823, %v2794, %v2818
        %vm2856 = vcmp.ge.f32.partialorder %v332, 14.0
        %v2857 = vsel %vm2856, 1, 0
        %v2858 = vcvt.s32.f32 %v2857
        %2859 = vset.pattern.permute.xlu0 14
        %2860 = vperm.xlu0 %2859, %v674
        %v2861 = vpop.permute.xlu0 %2860
        %2863 = vset.pattern.permute.xlu0 14
        %2864 = vperm.xlu0 %2863, %v675
        %v2865 = vpop.permute.xlu0 %2864
        %2867 = vset.pattern.permute.xlu0 14
        %2868 = vperm.xlu0 %2867, %v676
        %v2869 = vpop.permute.xlu0 %2868
        %2871 = vset.pattern.permute.xlu0 14
        %2872 = vperm.xlu0 %2871, %v677
        %v2873 = vpop.permute.xlu0 %2872
        %v2875 = vmul.f32 %v2852, %v2861
        %v2876 = vmul.f32 %v2824, %v2861
        %v2877 = vmul.f32 %v2825, %v2861
        %v2878 = vmul.f32 %v2826, %v2861
        %v2879 = vmul.f32 %v2853, %v2865
        %v2880 = vmul.f32 %v2827, %v2865
        %v2881 = vmul.f32 %v2828, %v2865
        %v2882 = vmul.f32 %v2829, %v2865
        %v2883 = vmul.f32 %v2854, %v2869
        %v2884 = vmul.f32 %v2830, %v2869
        %v2885 = vmul.f32 %v2831, %v2869
        %v2886 = vmul.f32 %v2832, %v2869
        %v2887 = vmul.f32 %v2855, %v2873
        %v2888 = vmul.f32 %v2833, %v2873
        %v2889 = vmul.f32 %v2834, %v2873
        %v2890 = vmul.f32 %v2835, %v2873
        %v2892 = vlaneseq
        %v2893 = vshrl.u32 %v2892, 7
        %v2894 = vsub.s32 0, %v2893
        %v2895 = vrot.slane %v2858, %v2894
        %v2896 = vlaneseq
        %v2897 = vshrl.u32 %v2896, 7
        %v2898 = vsub.s32 1, %v2897
        %v2899 = vrot.slane %v2858, %v2898
        %v2900 = vlaneseq
        %v2901 = vshrl.u32 %v2900, 7
        %v2902 = vsub.s32 2, %v2901
        %v2903 = vrot.slane %v2858, %v2902
        %v2904 = vlaneseq
        %v2905 = vshrl.u32 %v2904, 7
        %v2906 = vsub.s32 3, %v2905
        %v2907 = vrot.slane %v2858, %v2906
        %v2912 = vmul.f32 %v2875, %v2895
        %v2913 = vmul.f32 %v2876, %v2899
        %v2914 = vmul.f32 %v2877, %v2903
        %v2915 = vmul.f32 %v2878, %v2907
        %v2916 = vmul.f32 %v2879, %v2895
        %v2917 = vmul.f32 %v2880, %v2899
        %v2918 = vmul.f32 %v2881, %v2903
        %v2919 = vmul.f32 %v2882, %v2907
        %v2920 = vmul.f32 %v2883, %v2895
        %v2921 = vmul.f32 %v2884, %v2899
        %v2922 = vmul.f32 %v2885, %v2903
        %v2923 = vmul.f32 %v2886, %v2907
        %v2924 = vmul.f32 %v2887, %v2895
        %v2925 = vmul.f32 %v2888, %v2899
        %v2926 = vmul.f32 %v2889, %v2903
        %v2927 = vmul.f32 %v2890, %v2907
        %v2928 = vadd.f32 %v2771, %v2912
        %v2929 = vadd.f32 %v2772, %v2913
        %v2930 = vadd.f32 %v2773, %v2914
        %v2931 = vadd.f32 %v2774, %v2915
        %v2932 = vadd.f32 %v2775, %v2916
        %v2933 = vadd.f32 %v2776, %v2917
        %v2934 = vadd.f32 %v2777, %v2918
        %v2935 = vadd.f32 %v2778, %v2919
        %v2936 = vadd.f32 %v2779, %v2920
        %v2937 = vadd.f32 %v2780, %v2921
        %v2938 = vadd.f32 %v2781, %v2922
        %v2939 = vadd.f32 %v2782, %v2923
        %v2940 = vadd.f32 %v2783, %v2924
        %v2941 = vadd.f32 %v2784, %v2925
        %v2942 = vadd.f32 %v2785, %v2926
        %v2943 = vadd.f32 %v2786, %v2927
        %2944 = vrot.lane.b32.xlu0 %v658, 15
        %v2945 = vpop.permute.xlu0 %2944
        %2946 = vrot.lane.b32.xlu0 %v662, 15
        %v2947 = vpop.permute.xlu0 %2946
        %2948 = vrot.lane.b32.xlu0 %v668, 15
        %v2949 = vpop.permute.xlu0 %2948
        %2950 = vrot.lane.b32.xlu0 %v672, 15
        %v2951 = vpop.permute.xlu0 %2950
        %2956 = vrot.lane.b32.xlu0 %v603, 15
        %v2957 = vpop.permute.xlu0 %2956
        %2958 = vrot.lane.b32.xlu0 %v605, 15
        %v2959 = vpop.permute.xlu0 %2958
        %2960 = vrot.lane.b32.xlu0 %v656, 15
        %v2961 = vpop.permute.xlu0 %2960
        %2962 = vrot.lane.b32.xlu0 %v607, 15
        %v2963 = vpop.permute.xlu0 %2962
        %2964 = vrot.lane.b32.xlu0 %v609, 15
        %v2965 = vpop.permute.xlu0 %2964
        %2966 = vrot.lane.b32.xlu0 %v660, 15
        %v2967 = vpop.permute.xlu0 %2966
        %2968 = vrot.lane.b32.xlu0 %v613, 15
        %v2969 = vpop.permute.xlu0 %2968
        %2970 = vrot.lane.b32.xlu0 %v615, 15
        %v2971 = vpop.permute.xlu0 %2970
        %2972 = vrot.lane.b32.xlu0 %v666, 15
        %v2973 = vpop.permute.xlu0 %2972
        %2974 = vrot.lane.b32.xlu0 %v617, 15
        %v2975 = vpop.permute.xlu0 %2974
        %2976 = vrot.lane.b32.xlu0 %v619, 15
        %v2977 = vpop.permute.xlu0 %2976
        %2978 = vrot.lane.b32.xlu0 %v670, 15
        %v2979 = vpop.permute.xlu0 %2978
        %vm2980 = vcmask 121856
        %v2981 = vsel %vm2980, %v2957, %v2959
        %v2982 = vsel %vm2980, %v2959, %v2961
        %v2983 = vsel %vm2980, %v2961, %v2945
        %v2984 = vsel %vm2980, %v2963, %v2965
        %v2985 = vsel %vm2980, %v2965, %v2967
        %v2986 = vsel %vm2980, %v2967, %v2947
        %v2987 = vsel %vm2980, %v2969, %v2971
        %v2988 = vsel %vm2980, %v2971, %v2973
        %v2989 = vsel %vm2980, %v2973, %v2949
        %v2990 = vsel %vm2980, %v2975, %v2977
        %v2991 = vsel %vm2980, %v2977, %v2979
        %v2992 = vsel %vm2980, %v2979, %v2951
        %v3009 = vsel %vm2980, %v2945, %v2957
        %v3010 = vsel %vm2980, %v2947, %v2963
        %v3011 = vsel %vm2980, %v2949, %v2969
        %v3012 = vsel %vm2980, %v2951, %v2975
        %vm3013 = vcmp.ge.f32.partialorder %v332, 15.0
        %v3014 = vsel %vm3013, 1, 0
        %v3015 = vcvt.s32.f32 %v3014
        %3016 = vset.pattern.permute.xlu0 15
        %3017 = vperm.xlu0 %3016, %v674
        %v3018 = vpop.permute.xlu0 %3017
        %3020 = vset.pattern.permute.xlu0 15
        %3021 = vperm.xlu0 %3020, %v675
        %v3022 = vpop.permute.xlu0 %3021
        %3024 = vset.pattern.permute.xlu0 15
        %3025 = vperm.xlu0 %3024, %v676
        %v3026 = vpop.permute.xlu0 %3025
        %3028 = vset.pattern.permute.xlu0 15
        %3029 = vperm.xlu0 %3028, %v677
        %v3030 = vpop.permute.xlu0 %3029
        %v3032 = vmul.f32 %v3009, %v3018
        %v3033 = vmul.f32 %v2981, %v3018
        %v3034 = vmul.f32 %v2982, %v3018
        %v3035 = vmul.f32 %v2983, %v3018
        %v3036 = vmul.f32 %v3010, %v3022
        %v3037 = vmul.f32 %v2984, %v3022
        %v3038 = vmul.f32 %v2985, %v3022
        %v3039 = vmul.f32 %v2986, %v3022
        %v3040 = vmul.f32 %v3011, %v3026
        %v3041 = vmul.f32 %v2987, %v3026
        %v3042 = vmul.f32 %v2988, %v3026
        %v3043 = vmul.f32 %v2989, %v3026
        %v3044 = vmul.f32 %v3012, %v3030
        %v3045 = vmul.f32 %v2990, %v3030
        %v3046 = vmul.f32 %v2991, %v3030
        %v3047 = vmul.f32 %v2992, %v3030
        %v3049 = vlaneseq
        %v3050 = vshrl.u32 %v3049, 7
        %v3051 = vsub.s32 0, %v3050
        %v3052 = vrot.slane %v3015, %v3051
        %v3053 = vlaneseq
        %v3054 = vshrl.u32 %v3053, 7
        %v3055 = vsub.s32 1, %v3054
        %v3056 = vrot.slane %v3015, %v3055
        %v3057 = vlaneseq
        %v3058 = vshrl.u32 %v3057, 7
        %v3059 = vsub.s32 2, %v3058
        %v3060 = vrot.slane %v3015, %v3059
        %v3061 = vlaneseq
        %v3062 = vshrl.u32 %v3061, 7
        %v3063 = vsub.s32 3, %v3062
        %v3064 = vrot.slane %v3015, %v3063
        %v3069 = vmul.f32 %v3032, %v3052
        %v3070 = vmul.f32 %v3033, %v3056
        %v3071 = vmul.f32 %v3034, %v3060
        %v3072 = vmul.f32 %v3035, %v3064
        %v3073 = vmul.f32 %v3036, %v3052
        %v3074 = vmul.f32 %v3037, %v3056
        %v3075 = vmul.f32 %v3038, %v3060
        %v3076 = vmul.f32 %v3039, %v3064
        %v3077 = vmul.f32 %v3040, %v3052
        %v3078 = vmul.f32 %v3041, %v3056
        %v3079 = vmul.f32 %v3042, %v3060
        %v3080 = vmul.f32 %v3043, %v3064
        %v3081 = vmul.f32 %v3044, %v3052
        %v3082 = vmul.f32 %v3045, %v3056
        %v3083 = vmul.f32 %v3046, %v3060
        %v3084 = vmul.f32 %v3047, %v3064
        %v3085 = vadd.f32 %v2928, %v3069
        %v3086 = vadd.f32 %v2929, %v3070
        %v3087 = vadd.f32 %v2930, %v3071
        %v3088 = vadd.f32 %v2931, %v3072
        %v3089 = vadd.f32 %v2932, %v3073
        %v3090 = vadd.f32 %v2933, %v3074
        %v3091 = vadd.f32 %v2934, %v3075
        %v3092 = vadd.f32 %v2935, %v3076
        %v3093 = vadd.f32 %v2936, %v3077
        %v3094 = vadd.f32 %v2937, %v3078
        %v3095 = vadd.f32 %v2938, %v3079
        %v3096 = vadd.f32 %v2939, %v3080
        %v3097 = vadd.f32 %v2940, %v3081
        %v3098 = vadd.f32 %v2941, %v3082
        %v3099 = vadd.f32 %v2942, %v3083
        %v3100 = vadd.f32 %v2943, %v3084
        %3101 = vst [vmem:[%s302] sm:$0xff] %v3085
        %3102 = vst [vmem:[%s302 + $0x8] sm:$0xff] %v3086
        %3103 = vst [vmem:[%s302 + $0x10] sm:$0xff] %v3087
        %3104 = vst [vmem:[%s302 + $0x18] sm:$0xff] %v3088
        %3105 = vst [vmem:[%s302 + $0x20] sm:$0xff] %v3089
        %3106 = vst [vmem:[%s302 + $0x28] sm:$0xff] %v3090
        %3107 = vst [vmem:[%s302 + $0x30] sm:$0xff] %v3091
        %3108 = vst [vmem:[%s302 + $0x38] sm:$0xff] %v3092
        %3109 = vst [vmem:[%s302 + $0x40] sm:$0xff] %v3093
        %3110 = vst [vmem:[%s302 + $0x48] sm:$0xff] %v3094
        %3111 = vst [vmem:[%s302 + $0x50] sm:$0xff] %v3095
        %3112 = vst [vmem:[%s302 + $0x58] sm:$0xff] %v3096
        %3113 = vst [vmem:[%s302 + $0x60] sm:$0xff] %v3097
        %3114 = vst [vmem:[%s302 + $0x68] sm:$0xff] %v3098
        %3115 = vst [vmem:[%s302 + $0x70] sm:$0xff] %v3099
        %3116 = vst [vmem:[%s302 + $0x78] sm:$0xff] %v3100
        %s3117 = sand.u32 %s175, 1
        %s3118 = scalar_lea.sflag [#allocation4], %s3117
        %s3119 = sand.u32 %s175, 1
        %s3120 = smul.addr %s3119, 128
        %s3121 = scalar_lea.vmem [#allocation5], %s3120
        // Predicated region
        $region49: #{tpu_custom_call.1} parent=43 // pred_check
          %p3122 = pneg %p185
        $region50: #{tpu_custom_call.1} parent=43 // pred_check_branch
          %3124 = sbr.rel (%p3122) target = $region52
        $region51: #{tpu_custom_call.1} parent=43 // pred_region
          %s3126 = ssub.s32 2048, 2048
          %3127 = vsyncadd %s3118, %s3126
          %s3128 = smul.addr %s21, 16
          %s3129 = smul.addr %s3128, 128
          %s3130 = scalar_lea.hbm %s6, %s3129
          %s3131 = sshll.u32 %s3121, 4
          %s3132 = int_to_ptr.vmem [resolvable:$true] %s3131
          %3137 = dma.vmem_to_hbm [thread:$0]  %s3132, 2048, %s3130, %s3118, 512, 512, 32
        $region52: #{tpu_custom_call.1} parent=43 // pred_fallthru
          _
      $region44: #{tpu_custom_call.1} parent=5 // pred_fallthru
        _
      %p3138 = scmp.le.s32.totalorder 2, %s16
      // Predicated region
      $region53: #{tpu_custom_call.1} parent=5 // pred_check
        %p3139 = pneg %p3138
      $region54: #{tpu_custom_call.1} parent=5 // pred_check_branch
        %3141 = sbr.rel (%p3139) target = $region56
      $region55: #{tpu_custom_call.1} parent=5 // pred_region
        %s3142 = ssub.s32 %s16, 2
        // Predicated region
        $region57: #{tpu_custom_call.1} parent=55 // pred_check
          %p3143 = pneg %p191
        $region58: #{tpu_custom_call.1} parent=55 // pred_check_branch
          %3145 = sbr.rel (%p3143) target = $region60
        $region59: #{tpu_custom_call.1} parent=55 // pred_region
          %s3146 = sand.u32 %s176, 1
          %s3147 = scalar_lea.sflag [#allocation4], %s3146
          %s3148 = sand.u32 %s176, 1
          %s3149 = smul.addr %s3148, 128
          %s3150 = scalar_lea.vmem [#allocation5], %s3149
          %3151 = dma.done %s3147, 2048
        $region60: #{tpu_custom_call.1} parent=55 // pred_fallthru
          _
      $region56: #{tpu_custom_call.1} parent=5 // pred_fallthru
        _
    $region6: #{tpu_custom_call.1} parent=1 // loop_footer
      %s20 = sadd.s32 1, %s16
    $region7: #{tpu_custom_call.1} parent=1 // loop_footer_branch
      %15 = sbr.rel target = $region3
    $region8: #{tpu_custom_call.1} parent=1 // loop_exit
      _
    %3152 = vsyncpa [#allocation3], 1
    %s3153 = scalar_lea.sflag [#allocation3], 1
    %3154 = vsyncpa %s3153, 1
    %3155 = vsyncpa [#allocation4], 1
    %s3156 = scalar_lea.sflag [#allocation4], 1
    %3157 = vsyncpa %s3156, 1

</llo_original>
